<compile_context>
chip_gen: v7x
topology: tpu7x:2x2x1
jax: 0.10.0
libtpu: 0.0.40
codegen_flags: <defaults>
</compile_context>

<pallas_src>
import math

import jax
import jax.numpy as jnp
from jax.experimental import pallas as pl
from jax.experimental.pallas import tpu as pltpu

# ---- configuration (mirrors DiffusionInpainter.__init__ arguments) -------------------
NUM_STEPS = 4
NUM_RESAMPLES = 2
SIGMA_MIN = 1e-4
SIGMA_MAX = 3.0
RHO_SCHEDULE = 9.0      # KarrasSchedule rho
RHO_SAMPLER = 1.0       # ADPM2Sampler rho
SIGMA_DATA = 0.5        # KDiffusion sigma_data

B, C, T = 2, 32, 128    # batch, channels, time
BT = B * T              # fused lane dimension


def karras_schedule(num_steps):
    """KarrasSchedule.forward: num_steps sigmas, a trailing 0 appended (len = num_steps+1)."""
    rho_inv = 1.0 / RHO_SCHEDULE
    sig = []
    for i in range(num_steps):
        s = (SIGMA_MAX ** rho_inv
             + (i / (num_steps - 1)) * (SIGMA_MIN ** rho_inv - SIGMA_MAX ** rho_inv)
             ) ** RHO_SCHEDULE
        sig.append(float(s))
    sig.append(0.0)
    return sig


SIGMAS = karras_schedule(NUM_STEPS)
S1 = NUM_STEPS - 1                       # number of outer steps actually executed

# Packed per-step noise layout: [src(1), step(NUM_RESAMPLES), renoise(NUM_RESAMPLES-1)]
N_RENOISE = NUM_RESAMPLES - 1
PER_STEP = 1 + NUM_RESAMPLES + N_RENOISE

# -- static ADPM2 / KDiffusion scalar math (all plain Python floats) --------------------


def _step_sigmas(sigma, sigma_next):
    """ADPM2Sampler.step sigma arithmetic (static)."""
    r = RHO_SAMPLER
    sigma_up = math.sqrt(sigma_next ** 2 * (sigma ** 2 - sigma_next ** 2) / sigma ** 2)
    sigma_down = math.sqrt(sigma_next ** 2 - sigma_up ** 2)
    sigma_mid = ((sigma ** (1.0 / r) + sigma_down ** (1.0 / r)) / 2.0) ** r
    return sigma_up, sigma_down, sigma_mid


def _precond(sigma):
    """KDiffusion c_skip / c_out / c_in / c_noise (static)."""
    sd = SIGMA_DATA
    c_skip = sd * sd / (sigma * sigma + sd * sd)
    c_out = sigma * sd / math.sqrt(sd * sd + sigma * sigma)
    c_in = 1.0 / math.sqrt(sigma * sigma + sd * sd)
    c_noise = 0.25 * math.log(sigma)
    return c_skip, c_out, c_in, c_noise


def _folded_step_coeffs(sigma, sigma_next):
    """Fold the two ADPM2 half-steps into static linear-combination coefficients.

    x_mid  = A0*x + B0*p
    x_next = A1*x + B1*p + C1*p_mid + sigma_up*noise
    where p / p_mid are the synthetic-net tanh outputs at sigma / sigma_mid.
    """
    sigma_up, sigma_down, sigma_mid = _step_sigmas(sigma, sigma_next)
    cs0, co0, _, cn0 = _precond(sigma)
    cs1, co1, _, cn1 = _precond(sigma_mid)
    a0 = 1.0 + (sigma_mid - sigma) * (1.0 - cs0) / sigma
    b0 = -(sigma_mid - sigma) * co0 / sigma
    k = (sigma_down - sigma) * (1.0 - cs1) / sigma_mid
    a1 = 1.0 + k * a0
    b1 = k * b0
    c1 = -(sigma_down - sigma) * co1 / sigma_mid
    return a0, b0, a1, b1, c1, sigma_up, cn0, cn1


# The 2*S1 distinct sigmas at which denoise_fn is evaluated (sigma_i, sigma_mid_i per step).
DENOISE_SIGMAS = []
for _i in range(S1):
    _sig, _sig_next = SIGMAS[_i], SIGMAS[_i + 1]
    _, _, _sig_mid = _step_sigmas(_sig, _sig_next)
    DENOISE_SIGMAS.extend([_sig, _sig_mid])
ND = len(DENOISE_SIGMAS)                 # = 2 * S1


# ---- kernel ----------------------------------------------------------------------------
def inpaint_kernel(w_ref, bias_ref, src_ref, mask_ref, ninit_ref, noise_hbm,
                   out_ref, nbuf, sem):
    # w_ref:     (ND, C, C)            bf16, c_in(sigma_d) already folded in (VMEM)
    # bias_ref:  (C, 1)                f32  (VMEM)
    # src_ref:   (C, BT)               f32  (VMEM)
    # mask_ref:  (C, BT)               f32  (VMEM, 1.0 where source is kept)
    # ninit_ref: (C, BT)               f32  (VMEM)
    # noise_hbm: (S1, PER_STEP, C, BT) f32  (HBM, manually DMA'd)
    # nbuf:      (2, PER_STEP, C, BT)  f32  VMEM scratch (double buffer)
    # sem:       DMA semaphores (2,)

    # Prime the DMA for step 0's noise as early as possible.
    pltpu.make_async_copy(noise_hbm.at[0], nbuf.at[0], sem.at[0]).start()

    src = src_ref[...]
    mask = mask_ref[...]
    bvec = bias_ref[...]                           # (C, 1), broadcasts over lanes

    # ADPM2Sampler.inpaint: x = sigmas[0] * randn_like(source)
    x = SIGMAS[0] * ninit_ref[...]

    for i in range(S1):
        slot = i & 1
        # Wait for this step's noise; prefetch next step's into the other slot.
        pltpu.make_async_copy(noise_hbm.at[i], nbuf.at[slot], sem.at[slot]).wait()
        if i + 1 < S1:
            pltpu.make_async_copy(noise_hbm.at[i + 1], nbuf.at[1 - slot],
                                  sem.at[1 - slot]).start()

        sigma, sigma_next = SIGMAS[i], SIGMAS[i + 1]
        a0, b0c, a1, b1c, c1c, sigma_up, cn0, cn1 = _folded_step_coeffs(sigma, sigma_next)

        # Hoisted per-step loads / tiny precomputation (shared by both resamples).
        w0 = w_ref[2 * i]                          # (C, C) bf16
        w1 = w_ref[2 * i + 1]
        bias0 = cn0 * bvec                         # (C, 1)
        bias1 = cn1 * bvec
        source_noisy = src + sigma * nbuf[slot, 0]

        for rr in range(NUM_RESAMPLES):
            # merge noisy source and x:  source_noisy*mask + x*(1-mask)
            x = x + (source_noisy - x) * mask

            # ADPM2Sampler.step, folded into static-coefficient linear combinations.
            p = jnp.tanh(jnp.dot(w0, x.astype(jnp.bfloat16),
                                 preferred_element_type=jnp.float32) + bias0)
            x_mid = a0 * x + b0c * p
            p_mid = jnp.tanh(jnp.dot(w1, x_mid.astype(jnp.bfloat16),
                                     preferred_element_type=jnp.float32) + bias1)
            x = (a1 * x + b1c * p + c1c * p_mid
                 + sigma_up * nbuf[slot, 1 + rr])

            # renoise if not last resample step
            if rr < NUM_RESAMPLES - 1:
                s = math.sqrt(sigma ** 2 - sigma_next ** 2)
                x = x + s * nbuf[slot, 1 + NUM_RESAMPLES + rr]

    # final merge: source*mask + x*(1-mask)
    out_ref[...] = x + (src - x) * mask


# ---- wrapper ---------------------------------------------------------------------------
def _to_lanes(a):
    """(B, C, T) -> (C, B*T): fuse batch into the lane dimension."""
    return jnp.transpose(a, (1, 0, 2)).reshape(C, BT)


def _from_lanes(a):
    """(C, B*T) -> (B, C, T)."""
    return jnp.transpose(a.reshape(C, B, T), (1, 0, 2))


@jax.jit
def diffusion_inpaint(w, bias, source, mask, n_init, n_steps):
    # source, mask: (B, C, T)   f32
    # n_init:       (C, BT)     f32  (already in kernel layout)
    # n_steps:      (S1, PER_STEP, C, BT) f32  (already in kernel layout)
    # Fold the c_in preconditioning scalar into the tiny net weight, per distinct sigma.
    w_all = jnp.stack([( _precond(sig)[2] * w).astype(jnp.bfloat16)
                       for sig in DENOISE_SIGMAS])                     # (ND, C, C) bf16

    vmem = pl.BlockSpec(memory_space=pltpu.MemorySpace.VMEM)
    hbm = pl.BlockSpec(memory_space=pl.ANY)
    out = pl.pallas_call(
        inpaint_kernel,
        out_shape=jax.ShapeDtypeStruct((C, BT), jnp.float32),
        in_specs=[vmem, vmem, vmem, vmem, vmem, hbm],
        out_specs=vmem,
        scratch_shapes=[pltpu.VMEM((2, PER_STEP, C, BT), jnp.float32),
                        pltpu.SemaphoreType.DMA((2,))],
    )(w_all, bias, _to_lanes(source), _to_lanes(mask), n_init, n_steps)

    return _from_lanes(out)


if __name__ == "__main__":
    key = jax.random.PRNGKey(0)
    keys = jax.random.split(key, 6)

    # deterministic synthetic "denoise net" parameters
    w = jax.random.normal(keys[0], (C, C), jnp.float32) * (1.0 / math.sqrt(C))
    bias = jax.random.normal(keys[1], (C, 1), jnp.float32) * 0.1

    # inpaint inputs: keep first half of the time axis from the source
    source = jax.random.normal(keys[2], (B, C, T), jnp.float32)
    mask = jnp.concatenate(
        [jnp.ones((B, C, T // 2), jnp.float32),
         jnp.zeros((B, C, T - T // 2), jnp.float32)], axis=-1)

    # pre-drawn Gaussian noise standing in for torch.randn_like, drawn directly in the
    # fused kernel layout (per-step slab: [src, step_0..step_{R-1}, renoise_0..]).
    n_init = jax.random.normal(keys[3], (C, BT), jnp.float32)
    n_steps = jax.random.normal(keys[4], (S1, PER_STEP, C, BT), jnp.float32)

    out = diffusion_inpaint(w, bias, source, mask, n_init, n_steps)
    out = jax.block_until_ready(out)
    assert out.shape == (B, C, T)
    assert bool(jnp.all(jnp.isfinite(out)))
    print("KERNEL_OK")
</pallas_src>

<mosaic_0001>
module attributes {stable_mosaic.version = 11 : i64} {
  func.func @inpaint_kernel(%arg0: memref<6x32x32xbf16, #tpu.memory_space<vmem>>, %arg1: memref<32x1xf32, #tpu.memory_space<vmem>>, %arg2: memref<32x256xf32, #tpu.memory_space<vmem>>, %arg3: memref<32x256xf32, #tpu.memory_space<vmem>>, %arg4: memref<32x256xf32, #tpu.memory_space<vmem>>, %arg5: memref<3x4x32x256xf32, #tpu.memory_space<any>>, %arg6: memref<32x256xf32, #tpu.memory_space<vmem>>, %arg7: memref<2x4x32x256xf32, #tpu.memory_space<vmem>>, %arg8: memref<2x!tpu.dma_semaphore, #tpu.memory_space<semaphore_mem>>) attributes {dimension_semantics = [], scalar_prefetch = 0 : i64, scratch_operands = 2 : i64, tpu.core_type = #tpu.core_type<tc>} {
    %c0_i32 = arith.constant 0 : i32
    %c0_i32_0 = arith.constant 0 : i32
    %c0_i32_1 = arith.constant 0 : i32
    %c0_i32_2 = arith.constant 0 : i32
    %c0_i32_3 = arith.constant 0 : i32
    %c0_i32_4 = arith.constant 0 : i32
    %0 = tpu.memref_slice %arg5[%c0_i32, %c0_i32_2, %c0_i32_3, %c0_i32_4] : memref<3x4x32x256xf32, #tpu.memory_space<any>> -> memref<1x4x32x256xf32, #tpu.memory_space<any>>
    %1 = tpu.memref_squeeze %0 : memref<1x4x32x256xf32, #tpu.memory_space<any>> -> memref<4x32x256xf32, #tpu.memory_space<any>>
    %c0_i32_5 = arith.constant 0 : i32
    %c0_i32_6 = arith.constant 0 : i32
    %c0_i32_7 = arith.constant 0 : i32
    %2 = tpu.memref_slice %arg7[%c0_i32_0, %c0_i32_5, %c0_i32_6, %c0_i32_7] : memref<2x4x32x256xf32, #tpu.memory_space<vmem>> -> memref<1x4x32x256xf32, #tpu.memory_space<vmem>>
    %3 = tpu.memref_squeeze %2 : memref<1x4x32x256xf32, #tpu.memory_space<vmem>> -> memref<4x32x256xf32, #tpu.memory_space<vmem>>
    %4 = tpu.memref_slice %arg8[%c0_i32_1] : memref<2x!tpu.dma_semaphore, #tpu.memory_space<semaphore_mem>> -> memref<1x!tpu.dma_semaphore, #tpu.memory_space<semaphore_mem>>
    %5 = tpu.memref_squeeze %4 : memref<1x!tpu.dma_semaphore, #tpu.memory_space<semaphore_mem>> -> memref<!tpu.dma_semaphore, #tpu.memory_space<semaphore_mem>>
    tpu.enqueue_dma source(%1 : memref<4x32x256xf32, #tpu.memory_space<any>>) target(%3 : memref<4x32x256xf32, #tpu.memory_space<vmem>>) target_semaphore(%5 : memref<!tpu.dma_semaphore, #tpu.memory_space<semaphore_mem>>)
    %c0 = arith.constant 0 : index
    %c0_8 = arith.constant 0 : index
    %6 = vector.load %arg2[%c0, %c0_8] : memref<32x256xf32, #tpu.memory_space<vmem>>, vector<32x256xf32>
    %c0_9 = arith.constant 0 : index
    %c0_10 = arith.constant 0 : index
    %7 = vector.load %arg3[%c0_9, %c0_10] : memref<32x256xf32, #tpu.memory_space<vmem>>, vector<32x256xf32>
    %c0_11 = arith.constant 0 : index
    %c0_12 = arith.constant 0 : index
    %8 = vector.load %arg1[%c0_11, %c0_12] : memref<32x1xf32, #tpu.memory_space<vmem>>, vector<32x1xf32>
    %c0_13 = arith.constant 0 : index
    %c0_14 = arith.constant 0 : index
    %9 = vector.load %arg4[%c0_13, %c0_14] : memref<32x256xf32, #tpu.memory_space<vmem>>, vector<32x256xf32>
    %cst = arith.constant 3.000000e+00 : f32
    %10 = vector.broadcast %cst : f32 to vector<32x256xf32>
    %11 = arith.mulf %10, %9 : vector<32x256xf32>
    %c0_i32_15 = arith.constant 0 : i32
    %c0_i32_16 = arith.constant 0 : i32
    %c0_i32_17 = arith.constant 0 : i32
    %c0_i32_18 = arith.constant 0 : i32
    %c0_i32_19 = arith.constant 0 : i32
    %c0_i32_20 = arith.constant 0 : i32
    %12 = tpu.memref_slice %arg5[%c0_i32_15, %c0_i32_18, %c0_i32_19, %c0_i32_20] : memref<3x4x32x256xf32, #tpu.memory_space<any>> -> memref<1x4x32x256xf32, #tpu.memory_space<any>>
    %13 = tpu.memref_squeeze %12 : memref<1x4x32x256xf32, #tpu.memory_space<any>> -> memref<4x32x256xf32, #tpu.memory_space<any>>
    %c0_i32_21 = arith.constant 0 : i32
    %c0_i32_22 = arith.constant 0 : i32
    %c0_i32_23 = arith.constant 0 : i32
    %14 = tpu.memref_slice %arg7[%c0_i32_16, %c0_i32_21, %c0_i32_22, %c0_i32_23] : memref<2x4x32x256xf32, #tpu.memory_space<vmem>> -> memref<1x4x32x256xf32, #tpu.memory_space<vmem>>
    %15 = tpu.memref_squeeze %14 : memref<1x4x32x256xf32, #tpu.memory_space<vmem>> -> memref<4x32x256xf32, #tpu.memory_space<vmem>>
    %16 = tpu.memref_slice %arg8[%c0_i32_17] : memref<2x!tpu.dma_semaphore, #tpu.memory_space<semaphore_mem>> -> memref<1x!tpu.dma_semaphore, #tpu.memory_space<semaphore_mem>>
    %17 = tpu.memref_squeeze %16 : memref<1x!tpu.dma_semaphore, #tpu.memory_space<semaphore_mem>> -> memref<!tpu.dma_semaphore, #tpu.memory_space<semaphore_mem>>
    tpu.wait_dma2 semaphore(%17 : memref<!tpu.dma_semaphore, #tpu.memory_space<semaphore_mem>>) src(%13 : memref<4x32x256xf32, #tpu.memory_space<any>>) dst(%15 : memref<4x32x256xf32, #tpu.memory_space<vmem>>)
    %c1_i32 = arith.constant 1 : i32
    %c1_i32_24 = arith.constant 1 : i32
    %c1_i32_25 = arith.constant 1 : i32
    %c0_i32_26 = arith.constant 0 : i32
    %c0_i32_27 = arith.constant 0 : i32
    %c0_i32_28 = arith.constant 0 : i32
    %18 = tpu.memref_slice %arg5[%c1_i32, %c0_i32_26, %c0_i32_27, %c0_i32_28] : memref<3x4x32x256xf32, #tpu.memory_space<any>> -> memref<1x4x32x256xf32, #tpu.memory_space<any>>
    %19 = tpu.memref_squeeze %18 : memref<1x4x32x256xf32, #tpu.memory_space<any>> -> memref<4x32x256xf32, #tpu.memory_space<any>>
    %c0_i32_29 = arith.constant 0 : i32
    %c0_i32_30 = arith.constant 0 : i32
    %c0_i32_31 = arith.constant 0 : i32
    %20 = tpu.memref_slice %arg7[%c1_i32_24, %c0_i32_29, %c0_i32_30, %c0_i32_31] : memref<2x4x32x256xf32, #tpu.memory_space<vmem>> -> memref<1x4x32x256xf32, #tpu.memory_space<vmem>>
    %21 = tpu.memref_squeeze %20 : memref<1x4x32x256xf32, #tpu.memory_space<vmem>> -> memref<4x32x256xf32, #tpu.memory_space<vmem>>
    %22 = tpu.memref_slice %arg8[%c1_i32_25] : memref<2x!tpu.dma_semaphore, #tpu.memory_space<semaphore_mem>> -> memref<1x!tpu.dma_semaphore, #tpu.memory_space<semaphore_mem>>
    %23 = tpu.memref_squeeze %22 : memref<1x!tpu.dma_semaphore, #tpu.memory_space<semaphore_mem>> -> memref<!tpu.dma_semaphore, #tpu.memory_space<semaphore_mem>>
    tpu.enqueue_dma source(%19 : memref<4x32x256xf32, #tpu.memory_space<any>>) target(%21 : memref<4x32x256xf32, #tpu.memory_space<vmem>>) target_semaphore(%23 : memref<!tpu.dma_semaphore, #tpu.memory_space<semaphore_mem>>)
    %c0_32 = arith.constant 0 : index
    %c0_33 = arith.constant 0 : index
    %c0_34 = arith.constant 0 : index
    %24 = vector.load %arg0[%c0_32, %c0_33, %c0_34] : memref<6x32x32xbf16, #tpu.memory_space<vmem>>, vector<1x32x32xbf16>
    %25 = vector.shape_cast %24 : vector<1x32x32xbf16> to vector<32x32xbf16>
    %c1 = arith.constant 1 : index
    %c0_35 = arith.constant 0 : index
    %c0_36 = arith.constant 0 : index
    %26 = vector.load %arg0[%c1, %c0_35, %c0_36] : memref<6x32x32xbf16, #tpu.memory_space<vmem>>, vector<1x32x32xbf16>
    %27 = vector.shape_cast %26 : vector<1x32x32xbf16> to vector<32x32xbf16>
    %cst_37 = arith.constant 0.274653077 : f32
    %28 = vector.broadcast %cst_37 : f32 to vector<32x1xf32>
    %29 = arith.mulf %28, %8 : vector<32x1xf32>
    %cst_38 = arith.constant 0.1037651 : f32
    %30 = vector.broadcast %cst_38 : f32 to vector<32x1xf32>
    %31 = arith.mulf %30, %8 : vector<32x1xf32>
    %c0_39 = arith.constant 0 : index
    %c0_40 = arith.constant 0 : index
    %c0_41 = arith.constant 0 : index
    %c0_42 = arith.constant 0 : index
    %32 = vector.load %arg7[%c0_39, %c0_40, %c0_41, %c0_42] : memref<2x4x32x256xf32, #tpu.memory_space<vmem>>, vector<1x1x32x256xf32>
    %33 = vector.shape_cast %32 : vector<1x1x32x256xf32> to vector<32x256xf32>
    %cst_43 = arith.constant 3.000000e+00 : f32
    %34 = vector.broadcast %cst_43 : f32 to vector<32x256xf32>
    %35 = arith.mulf %34, %33 : vector<32x256xf32>
    %36 = arith.addf %6, %35 : vector<32x256xf32>
    %37 = arith.subf %36, %11 : vector<32x256xf32>
    %38 = arith.mulf %37, %7 : vector<32x256xf32>
    %39 = arith.addf %11, %38 : vector<32x256xf32>
    %40 = arith.truncf %39 : vector<32x256xf32> to vector<32x256xbf16>
    %cst_44 = arith.constant dense<0.000000e+00> : vector<32x256xf32>
    %41 = tpu.matmul %25, %40, %cst_44 {dimension_numbers = #tpu.dot_dimension_numbers<[1], [0], [0], [1], [0, 0, 1, 1], [], []>} : vector<32x32xbf16>, vector<32x256xbf16>, vector<32x256xf32> -> vector<32x256xf32>
    %42 = vector.broadcast %29 : vector<32x1xf32> to vector<32x256xf32>
    %43 = arith.addf %41, %42 : vector<32x256xf32>
    %44 = math.tanh %43 : vector<32x256xf32>
    %cst_45 = arith.constant 5.182040e-01 : f32
    %45 = vector.broadcast %cst_45 : f32 to vector<32x256xf32>
    %46 = arith.mulf %45, %39 : vector<32x256xf32>
    %cst_46 = arith.constant 0.244220912 : f32
    %47 = vector.broadcast %cst_46 : f32 to vector<32x256xf32>
    %48 = arith.mulf %47, %44 : vector<32x256xf32>
    %49 = arith.addf %46, %48 : vector<32x256xf32>
    %50 = arith.truncf %49 : vector<32x256xf32> to vector<32x256xbf16>
    %cst_47 = arith.constant dense<0.000000e+00> : vector<32x256xf32>
    %51 = tpu.matmul %27, %50, %cst_47 {dimension_numbers = #tpu.dot_dimension_numbers<[1], [0], [0], [1], [0, 0, 1, 1], [], []>} : vector<32x32xbf16>, vector<32x256xbf16>, vector<32x256xf32> -> vector<32x256xf32>
    %52 = vector.broadcast %31 : vector<32x1xf32> to vector<32x256xf32>
    %53 = arith.addf %51, %52 : vector<32x256xf32>
    %54 = math.tanh %53 : vector<32x256xf32>
    %cst_48 = arith.constant 0.0833051875 : f32
    %55 = vector.broadcast %cst_48 : f32 to vector<32x256xf32>
    %56 = arith.mulf %55, %39 : vector<32x256xf32>
    %cst_49 = arith.constant -0.432023019 : f32
    %57 = vector.broadcast %cst_49 : f32 to vector<32x256xf32>
    %58 = arith.mulf %57, %44 : vector<32x256xf32>
    %59 = arith.addf %56, %58 : vector<32x256xf32>
    %cst_50 = arith.constant 0.931450247 : f32
    %60 = vector.broadcast %cst_50 : f32 to vector<32x256xf32>
    %61 = arith.mulf %60, %54 : vector<32x256xf32>
    %62 = arith.addf %59, %61 : vector<32x256xf32>
    %c0_51 = arith.constant 0 : index
    %c1_52 = arith.constant 1 : index
    %c0_53 = arith.constant 0 : index
    %c0_54 = arith.constant 0 : index
    %63 = vector.load %arg7[%c0_51, %c1_52, %c0_53, %c0_54] : memref<2x4x32x256xf32, #tpu.memory_space<vmem>>, vector<1x1x32x256xf32>
    %64 = vector.shape_cast %63 : vector<1x1x32x256xf32> to vector<32x256xf32>
    %cst_55 = arith.constant 0.293149412 : f32
    %65 = vector.broadcast %cst_55 : f32 to vector<32x256xf32>
    %66 = arith.mulf %65, %64 : vector<32x256xf32>
    %67 = arith.addf %62, %66 : vector<32x256xf32>
    %c0_56 = arith.constant 0 : index
    %c3 = arith.constant 3 : index
    %c0_57 = arith.constant 0 : index
    %c0_58 = arith.constant 0 : index
    %68 = vector.load %arg7[%c0_56, %c3, %c0_57, %c0_58] : memref<2x4x32x256xf32, #tpu.memory_space<vmem>>, vector<1x1x32x256xf32>
    %69 = vector.shape_cast %68 : vector<1x1x32x256xf32> to vector<32x256xf32>
    %cst_59 = arith.constant 2.98550272 : f32
    %70 = vector.broadcast %cst_59 : f32 to vector<32x256xf32>
    %71 = arith.mulf %70, %69 : vector<32x256xf32>
    %72 = arith.addf %67, %71 : vector<32x256xf32>
    %73 = arith.subf %36, %72 : vector<32x256xf32>
    %74 = arith.mulf %73, %7 : vector<32x256xf32>
    %75 = arith.addf %72, %74 : vector<32x256xf32>
    %76 = arith.truncf %75 : vector<32x256xf32> to vector<32x256xbf16>
    %cst_60 = arith.constant dense<0.000000e+00> : vector<32x256xf32>
    %77 = tpu.matmul %25, %76, %cst_60 {dimension_numbers = #tpu.dot_dimension_numbers<[1], [0], [0], [1], [0, 0, 1, 1], [], []>} : vector<32x32xbf16>, vector<32x256xbf16>, vector<32x256xf32> -> vector<32x256xf32>
    %78 = vector.broadcast %29 : vector<32x1xf32> to vector<32x256xf32>
    %79 = arith.addf %77, %78 : vector<32x256xf32>
    %80 = math.tanh %79 : vector<32x256xf32>
    %cst_61 = arith.constant 5.182040e-01 : f32
    %81 = vector.broadcast %cst_61 : f32 to vector<32x256xf32>
    %82 = arith.mulf %81, %75 : vector<32x256xf32>
    %cst_62 = arith.constant 0.244220912 : f32
    %83 = vector.broadcast %cst_62 : f32 to vector<32x256xf32>
    %84 = arith.mulf %83, %80 : vector<32x256xf32>
    %85 = arith.addf %82, %84 : vector<32x256xf32>
    %86 = arith.truncf %85 : vector<32x256xf32> to vector<32x256xbf16>
    %cst_63 = arith.constant dense<0.000000e+00> : vector<32x256xf32>
    %87 = tpu.matmul %27, %86, %cst_63 {dimension_numbers = #tpu.dot_dimension_numbers<[1], [0], [0], [1], [0, 0, 1, 1], [], []>} : vector<32x32xbf16>, vector<32x256xbf16>, vector<32x256xf32> -> vector<32x256xf32>
    %88 = vector.broadcast %31 : vector<32x1xf32> to vector<32x256xf32>
    %89 = arith.addf %87, %88 : vector<32x256xf32>
    %90 = math.tanh %89 : vector<32x256xf32>
    %cst_64 = arith.constant 0.0833051875 : f32
    %91 = vector.broadcast %cst_64 : f32 to vector<32x256xf32>
    %92 = arith.mulf %91, %75 : vector<32x256xf32>
    %cst_65 = arith.constant -0.432023019 : f32
    %93 = vector.broadcast %cst_65 : f32 to vector<32x256xf32>
    %94 = arith.mulf %93, %80 : vector<32x256xf32>
    %95 = arith.addf %92, %94 : vector<32x256xf32>
    %cst_66 = arith.constant 0.931450247 : f32
    %96 = vector.broadcast %cst_66 : f32 to vector<32x256xf32>
    %97 = arith.mulf %96, %90 : vector<32x256xf32>
    %98 = arith.addf %95, %97 : vector<32x256xf32>
    %c0_67 = arith.constant 0 : index
    %c2 = arith.constant 2 : index
    %c0_68 = arith.constant 0 : index
    %c0_69 = arith.constant 0 : index
    %99 = vector.load %arg7[%c0_67, %c2, %c0_68, %c0_69] : memref<2x4x32x256xf32, #tpu.memory_space<vmem>>, vector<1x1x32x256xf32>
    %100 = vector.shape_cast %99 : vector<1x1x32x256xf32> to vector<32x256xf32>
    %cst_70 = arith.constant 0.293149412 : f32
    %101 = vector.broadcast %cst_70 : f32 to vector<32x256xf32>
    %102 = arith.mulf %101, %100 : vector<32x256xf32>
    %103 = arith.addf %98, %102 : vector<32x256xf32>
    %c1_i32_71 = arith.constant 1 : i32
    %c1_i32_72 = arith.constant 1 : i32
    %c1_i32_73 = arith.constant 1 : i32
    %c0_i32_74 = arith.constant 0 : i32
    %c0_i32_75 = arith.constant 0 : i32
    %c0_i32_76 = arith.constant 0 : i32
    %104 = tpu.memref_slice %arg5[%c1_i32_71, %c0_i32_74, %c0_i32_75, %c0_i32_76] : memref<3x4x32x256xf32, #tpu.memory_space<any>> -> memref<1x4x32x256xf32, #tpu.memory_space<any>>
    %105 = tpu.memref_squeeze %104 : memref<1x4x32x256xf32, #tpu.memory_space<any>> -> memref<4x32x256xf32, #tpu.memory_space<any>>
    %c0_i32_77 = arith.constant 0 : i32
    %c0_i32_78 = arith.constant 0 : i32
    %c0_i32_79 = arith.constant 0 : i32
    %106 = tpu.memref_slice %arg7[%c1_i32_72, %c0_i32_77, %c0_i32_78, %c0_i32_79] : memref<2x4x32x256xf32, #tpu.memory_space<vmem>> -> memref<1x4x32x256xf32, #tpu.memory_space<vmem>>
    %107 = tpu.memref_squeeze %106 : memref<1x4x32x256xf32, #tpu.memory_space<vmem>> -> memref<4x32x256xf32, #tpu.memory_space<vmem>>
    %108 = tpu.memref_slice %arg8[%c1_i32_73] : memref<2x!tpu.dma_semaphore, #tpu.memory_space<semaphore_mem>> -> memref<1x!tpu.dma_semaphore, #tpu.memory_space<semaphore_mem>>
    %109 = tpu.memref_squeeze %108 : memref<1x!tpu.dma_semaphore, #tpu.memory_space<semaphore_mem>> -> memref<!tpu.dma_semaphore, #tpu.memory_space<semaphore_mem>>
    tpu.wait_dma2 semaphore(%109 : memref<!tpu.dma_semaphore, #tpu.memory_space<semaphore_mem>>) src(%105 : memref<4x32x256xf32, #tpu.memory_space<any>>) dst(%107 : memref<4x32x256xf32, #tpu.memory_space<vmem>>)
    %c2_i32 = arith.constant 2 : i32
    %c0_i32_80 = arith.constant 0 : i32
    %c0_i32_81 = arith.constant 0 : i32
    %c0_i32_82 = arith.constant 0 : i32
    %c0_i32_83 = arith.constant 0 : i32
    %c0_i32_84 = arith.constant 0 : i32
    %110 = tpu.memref_slice %arg5[%c2_i32, %c0_i32_82, %c0_i32_83, %c0_i32_84] : memref<3x4x32x256xf32, #tpu.memory_space<any>> -> memref<1x4x32x256xf32, #tpu.memory_space<any>>
    %111 = tpu.memref_squeeze %110 : memref<1x4x32x256xf32, #tpu.memory_space<any>> -> memref<4x32x256xf32, #tpu.memory_space<any>>
    %c0_i32_85 = arith.constant 0 : i32
    %c0_i32_86 = arith.constant 0 : i32
    %c0_i32_87 = arith.constant 0 : i32
    %112 = tpu.memref_slice %arg7[%c0_i32_80, %c0_i32_85, %c0_i32_86, %c0_i32_87] : memref<2x4x32x256xf32, #tpu.memory_space<vmem>> -> memref<1x4x32x256xf32, #tpu.memory_space<vmem>>
    %113 = tpu.memref_squeeze %112 : memref<1x4x32x256xf32, #tpu.memory_space<vmem>> -> memref<4x32x256xf32, #tpu.memory_space<vmem>>
    %114 = tpu.memref_slice %arg8[%c0_i32_81] : memref<2x!tpu.dma_semaphore, #tpu.memory_space<semaphore_mem>> -> memref<1x!tpu.dma_semaphore, #tpu.memory_space<semaphore_mem>>
    %115 = tpu.memref_squeeze %114 : memref<1x!tpu.dma_semaphore, #tpu.memory_space<semaphore_mem>> -> memref<!tpu.dma_semaphore, #tpu.memory_space<semaphore_mem>>
    tpu.enqueue_dma source(%111 : memref<4x32x256xf32, #tpu.memory_space<any>>) target(%113 : memref<4x32x256xf32, #tpu.memory_space<vmem>>) target_semaphore(%115 : memref<!tpu.dma_semaphore, #tpu.memory_space<semaphore_mem>>)
    %c2_88 = arith.constant 2 : index
    %c0_89 = arith.constant 0 : index
    %c0_90 = arith.constant 0 : index
    %116 = vector.load %arg0[%c2_88, %c0_89, %c0_90] : memref<6x32x32xbf16, #tpu.memory_space<vmem>>, vector<1x32x32xbf16>
    %117 = vector.shape_cast %116 : vector<1x32x32xbf16> to vector<32x32xbf16>
    %c3_91 = arith.constant 3 : index
    %c0_92 = arith.constant 0 : index
    %c0_93 = arith.constant 0 : index
    %118 = vector.load %arg0[%c3_91, %c0_92, %c0_93] : memref<6x32x32xbf16, #tpu.memory_space<vmem>>, vector<1x32x32xbf16>
    %119 = vector.shape_cast %118 : vector<1x32x32xbf16> to vector<32x32xbf16>
    %cst_94 = arith.constant -0.305557191 : f32
    %120 = vector.broadcast %cst_94 : f32 to vector<32x1xf32>
    %121 = arith.mulf %120, %8 : vector<32x1xf32>
    %cst_95 = arith.constant -0.478371799 : f32
    %122 = vector.broadcast %cst_95 : f32 to vector<32x1xf32>
    %123 = arith.mulf %122, %8 : vector<32x1xf32>
    %c1_96 = arith.constant 1 : index
    %c0_97 = arith.constant 0 : index
    %c0_98 = arith.constant 0 : index
    %c0_99 = arith.constant 0 : index
    %124 = vector.load %arg7[%c1_96, %c0_97, %c0_98, %c0_99] : memref<2x4x32x256xf32, #tpu.memory_space<vmem>>, vector<1x1x32x256xf32>
    %125 = vector.shape_cast %124 : vector<1x1x32x256xf32> to vector<32x256xf32>
    %cst_100 = arith.constant 0.29457292 : f32
    %126 = vector.broadcast %cst_100 : f32 to vector<32x256xf32>
    %127 = arith.mulf %126, %125 : vector<32x256xf32>
    %128 = arith.addf %6, %127 : vector<32x256xf32>
    %129 = arith.subf %128, %103 : vector<32x256xf32>
    %130 = arith.mulf %129, %7 : vector<32x256xf32>
    %131 = arith.addf %103, %130 : vector<32x256xf32>
    %132 = arith.truncf %131 : vector<32x256xf32> to vector<32x256xbf16>
    %cst_101 = arith.constant dense<0.000000e+00> : vector<32x256xf32>
    %133 = tpu.matmul %117, %132, %cst_101 {dimension_numbers = #tpu.dot_dimension_numbers<[1], [0], [0], [1], [0, 0, 1, 1], [], []>} : vector<32x32xbf16>, vector<32x256xbf16>, vector<32x256xf32> -> vector<32x256xf32>
    %134 = vector.broadcast %121 : vector<32x1xf32> to vector<32x256xf32>
    %135 = arith.addf %133, %134 : vector<32x256xf32>
    %136 = math.tanh %135 : vector<32x256xf32>
    %cst_102 = arith.constant 0.87141323 : f32
    %137 = vector.broadcast %cst_102 : f32 to vector<32x256xf32>
    %138 = arith.mulf %137, %131 : vector<32x256xf32>
    %cst_103 = arith.constant 0.126660809 : f32
    %139 = vector.broadcast %cst_103 : f32 to vector<32x256xf32>
    %140 = arith.mulf %139, %136 : vector<32x256xf32>
    %141 = arith.addf %138, %140 : vector<32x256xf32>
    %142 = arith.truncf %141 : vector<32x256xf32> to vector<32x256xbf16>
    %cst_104 = arith.constant dense<0.000000e+00> : vector<32x256xf32>
    %143 = tpu.matmul %119, %142, %cst_104 {dimension_numbers = #tpu.dot_dimension_numbers<[1], [0], [0], [1], [0, 0, 1, 1], [], []>} : vector<32x32xbf16>, vector<32x256xbf16>, vector<32x256xf32> -> vector<32x256xf32>
    %144 = vector.broadcast %123 : vector<32x1xf32> to vector<32x256xf32>
    %145 = arith.addf %143, %144 : vector<32x256xf32>
    %146 = math.tanh %145 : vector<32x256xf32>
    %cst_105 = arith.constant 0.860886871 : f32
    %147 = vector.broadcast %cst_105 : f32 to vector<32x256xf32>
    %148 = arith.mulf %147, %131 : vector<32x256xf32>
    %cst_106 = arith.constant -0.0202202331 : f32
    %149 = vector.broadcast %cst_106 : f32 to vector<32x256xf32>
    %150 = arith.mulf %149, %136 : vector<32x256xf32>
    %151 = arith.addf %148, %150 : vector<32x256xf32>
    %cst_107 = arith.constant 0.281991452 : f32
    %152 = vector.broadcast %cst_107 : f32 to vector<32x256xf32>
    %153 = arith.mulf %152, %146 : vector<32x256xf32>
    %154 = arith.addf %151, %153 : vector<32x256xf32>
    %c1_108 = arith.constant 1 : index
    %c1_109 = arith.constant 1 : index
    %c0_110 = arith.constant 0 : index
    %c0_111 = arith.constant 0 : index
    %155 = vector.load %arg7[%c1_108, %c1_109, %c0_110, %c0_111] : memref<2x4x32x256xf32, #tpu.memory_space<vmem>>, vector<1x1x32x256xf32>
    %156 = vector.shape_cast %155 : vector<1x1x32x256xf32> to vector<32x256xf32>
    %cst_112 = arith.constant 0.0127959056 : f32
    %157 = vector.broadcast %cst_112 : f32 to vector<32x256xf32>
    %158 = arith.mulf %157, %156 : vector<32x256xf32>
    %159 = arith.addf %154, %158 : vector<32x256xf32>
    %c1_113 = arith.constant 1 : index
    %c3_114 = arith.constant 3 : index
    %c0_115 = arith.constant 0 : index
    %c0_116 = arith.constant 0 : index
    %160 = vector.load %arg7[%c1_113, %c3_114, %c0_115, %c0_116] : memref<2x4x32x256xf32, #tpu.memory_space<vmem>>, vector<1x1x32x256xf32>
    %161 = vector.shape_cast %160 : vector<1x1x32x256xf32> to vector<32x256xf32>
    %cst_117 = arith.constant 0.294294327 : f32
    %162 = vector.broadcast %cst_117 : f32 to vector<32x256xf32>
    %163 = arith.mulf %162, %161 : vector<32x256xf32>
    %164 = arith.addf %159, %163 : vector<32x256xf32>
    %165 = arith.subf %128, %164 : vector<32x256xf32>
    %166 = arith.mulf %165, %7 : vector<32x256xf32>
    %167 = arith.addf %164, %166 : vector<32x256xf32>
    %168 = arith.truncf %167 : vector<32x256xf32> to vector<32x256xbf16>
    %cst_118 = arith.constant dense<0.000000e+00> : vector<32x256xf32>
    %169 = tpu.matmul %117, %168, %cst_118 {dimension_numbers = #tpu.dot_dimension_numbers<[1], [0], [0], [1], [0, 0, 1, 1], [], []>} : vector<32x32xbf16>, vector<32x256xbf16>, vector<32x256xf32> -> vector<32x256xf32>
    %170 = vector.broadcast %121 : vector<32x1xf32> to vector<32x256xf32>
    %171 = arith.addf %169, %170 : vector<32x256xf32>
    %172 = math.tanh %171 : vector<32x256xf32>
    %cst_119 = arith.constant 0.87141323 : f32
    %173 = vector.broadcast %cst_119 : f32 to vector<32x256xf32>
    %174 = arith.mulf %173, %167 : vector<32x256xf32>
    %cst_120 = arith.constant 0.126660809 : f32
    %175 = vector.broadcast %cst_120 : f32 to vector<32x256xf32>
    %176 = arith.mulf %175, %172 : vector<32x256xf32>
    %177 = arith.addf %174, %176 : vector<32x256xf32>
    %178 = arith.truncf %177 : vector<32x256xf32> to vector<32x256xbf16>
    %cst_121 = arith.constant dense<0.000000e+00> : vector<32x256xf32>
    %179 = tpu.matmul %119, %178, %cst_121 {dimension_numbers = #tpu.dot_dimension_numbers<[1], [0], [0], [1], [0, 0, 1, 1], [], []>} : vector<32x32xbf16>, vector<32x256xbf16>, vector<32x256xf32> -> vector<32x256xf32>
    %180 = vector.broadcast %123 : vector<32x1xf32> to vector<32x256xf32>
    %181 = arith.addf %179, %180 : vector<32x256xf32>
    %182 = math.tanh %181 : vector<32x256xf32>
    %cst_122 = arith.constant 0.860886871 : f32
    %183 = vector.broadcast %cst_122 : f32 to vector<32x256xf32>
    %184 = arith.mulf %183, %167 : vector<32x256xf32>
    %cst_123 = arith.constant -0.0202202331 : f32
    %185 = vector.broadcast %cst_123 : f32 to vector<32x256xf32>
    %186 = arith.mulf %185, %172 : vector<32x256xf32>
    %187 = arith.addf %184, %186 : vector<32x256xf32>
    %cst_124 = arith.constant 0.281991452 : f32
    %188 = vector.broadcast %cst_124 : f32 to vector<32x256xf32>
    %189 = arith.mulf %188, %182 : vector<32x256xf32>
    %190 = arith.addf %187, %189 : vector<32x256xf32>
    %c1_125 = arith.constant 1 : index
    %c2_126 = arith.constant 2 : index
    %c0_127 = arith.constant 0 : index
    %c0_128 = arith.constant 0 : index
    %191 = vector.load %arg7[%c1_125, %c2_126, %c0_127, %c0_128] : memref<2x4x32x256xf32, #tpu.memory_space<vmem>>, vector<1x1x32x256xf32>
    %192 = vector.shape_cast %191 : vector<1x1x32x256xf32> to vector<32x256xf32>
    %cst_129 = arith.constant 0.0127959056 : f32
    %193 = vector.broadcast %cst_129 : f32 to vector<32x256xf32>
    %194 = arith.mulf %193, %192 : vector<32x256xf32>
    %195 = arith.addf %190, %194 : vector<32x256xf32>
    %c2_i32_130 = arith.constant 2 : i32
    %c0_i32_131 = arith.constant 0 : i32
    %c0_i32_132 = arith.constant 0 : i32
    %c0_i32_133 = arith.constant 0 : i32
    %c0_i32_134 = arith.constant 0 : i32
    %c0_i32_135 = arith.constant 0 : i32
    %196 = tpu.memref_slice %arg5[%c2_i32_130, %c0_i32_133, %c0_i32_134, %c0_i32_135] : memref<3x4x32x256xf32, #tpu.memory_space<any>> -> memref<1x4x32x256xf32, #tpu.memory_space<any>>
    %197 = tpu.memref_squeeze %196 : memref<1x4x32x256xf32, #tpu.memory_space<any>> -> memref<4x32x256xf32, #tpu.memory_space<any>>
    %c0_i32_136 = arith.constant 0 : i32
    %c0_i32_137 = arith.constant 0 : i32
    %c0_i32_138 = arith.constant 0 : i32
    %198 = tpu.memref_slice %arg7[%c0_i32_131, %c0_i32_136, %c0_i32_137, %c0_i32_138] : memref<2x4x32x256xf32, #tpu.memory_space<vmem>> -> memref<1x4x32x256xf32, #tpu.memory_space<vmem>>
    %199 = tpu.memref_squeeze %198 : memref<1x4x32x256xf32, #tpu.memory_space<vmem>> -> memref<4x32x256xf32, #tpu.memory_space<vmem>>
    %200 = tpu.memref_slice %arg8[%c0_i32_132] : memref<2x!tpu.dma_semaphore, #tpu.memory_space<semaphore_mem>> -> memref<1x!tpu.dma_semaphore, #tpu.memory_space<semaphore_mem>>
    %201 = tpu.memref_squeeze %200 : memref<1x!tpu.dma_semaphore, #tpu.memory_space<semaphore_mem>> -> memref<!tpu.dma_semaphore, #tpu.memory_space<semaphore_mem>>
    tpu.wait_dma2 semaphore(%201 : memref<!tpu.dma_semaphore, #tpu.memory_space<semaphore_mem>>) src(%197 : memref<4x32x256xf32, #tpu.memory_space<any>>) dst(%199 : memref<4x32x256xf32, #tpu.memory_space<vmem>>)
    %c4 = arith.constant 4 : index
    %c0_139 = arith.constant 0 : index
    %c0_140 = arith.constant 0 : index
    %202 = vector.load %arg0[%c4, %c0_139, %c0_140] : memref<6x32x32xbf16, #tpu.memory_space<vmem>>, vector<1x32x32xbf16>
    %203 = vector.shape_cast %202 : vector<1x32x32xbf16> to vector<32x32xbf16>
    %c5 = arith.constant 5 : index
    %c0_141 = arith.constant 0 : index
    %c0_142 = arith.constant 0 : index
    %204 = vector.load %arg0[%c5, %c0_141, %c0_142] : memref<6x32x32xbf16, #tpu.memory_space<vmem>>, vector<1x32x32xbf16>
    %205 = vector.shape_cast %204 : vector<1x32x32xbf16> to vector<32x32xbf16>
    %cst_143 = arith.constant -1.08942103 : f32
    %206 = vector.broadcast %cst_143 : f32 to vector<32x1xf32>
    %207 = arith.mulf %206, %8 : vector<32x1xf32>
    %cst_144 = arith.constant -1.26269257 : f32
    %208 = vector.broadcast %cst_144 : f32 to vector<32x1xf32>
    %209 = arith.mulf %208, %8 : vector<32x1xf32>
    %c0_145 = arith.constant 0 : index
    %c0_146 = arith.constant 0 : index
    %c0_147 = arith.constant 0 : index
    %c0_148 = arith.constant 0 : index
    %210 = vector.load %arg7[%c0_145, %c0_146, %c0_147, %c0_148] : memref<2x4x32x256xf32, #tpu.memory_space<vmem>>, vector<1x1x32x256xf32>
    %211 = vector.shape_cast %210 : vector<1x1x32x256xf32> to vector<32x256xf32>
    %cst_149 = arith.constant 0.0128080174 : f32
    %212 = vector.broadcast %cst_149 : f32 to vector<32x256xf32>
    %213 = arith.mulf %212, %211 : vector<32x256xf32>
    %214 = arith.addf %6, %213 : vector<32x256xf32>
    %215 = arith.subf %214, %195 : vector<32x256xf32>
    %216 = arith.mulf %215, %7 : vector<32x256xf32>
    %217 = arith.addf %195, %216 : vector<32x256xf32>
    %218 = arith.truncf %217 : vector<32x256xf32> to vector<32x256xbf16>
    %cst_150 = arith.constant dense<0.000000e+00> : vector<32x256xf32>
    %219 = tpu.matmul %203, %218, %cst_150 {dimension_numbers = #tpu.dot_dimension_numbers<[1], [0], [0], [1], [0, 0, 1, 1], [], []>} : vector<32x32xbf16>, vector<32x256xbf16>, vector<32x256xf32> -> vector<32x256xf32>
    %220 = vector.broadcast %207 : vector<32x1xf32> to vector<32x256xf32>
    %221 = arith.addf %219, %220 : vector<32x256xf32>
    %222 = math.tanh %221 : vector<32x256xf32>
    %cst_151 = arith.constant 0.999672114 : f32
    %223 = vector.broadcast %cst_151 : f32 to vector<32x256xf32>
    %224 = arith.mulf %223, %217 : vector<32x256xf32>
    %cst_152 = arith.constant 0.00640151835 : f32
    %225 = vector.broadcast %cst_152 : f32 to vector<32x256xf32>
    %226 = arith.mulf %225, %222 : vector<32x256xf32>
    %227 = arith.addf %224, %226 : vector<32x256xf32>
    %228 = arith.truncf %227 : vector<32x256xf32> to vector<32x256xbf16>
    %cst_153 = arith.constant dense<0.000000e+00> : vector<32x256xf32>
    %229 = tpu.matmul %205, %228, %cst_153 {dimension_numbers = #tpu.dot_dimension_numbers<[1], [0], [0], [1], [0, 0, 1, 1], [], []>} : vector<32x32xbf16>, vector<32x256xbf16>, vector<32x256xf32> -> vector<32x256xf32>
    %230 = vector.broadcast %209 : vector<32x1xf32> to vector<32x256xf32>
    %231 = arith.addf %229, %230 : vector<32x256xf32>
    %232 = math.tanh %231 : vector<32x256xf32>
    %cst_154 = arith.constant 0.999672055 : f32
    %233 = vector.broadcast %cst_154 : f32 to vector<32x256xf32>
    %234 = arith.mulf %233, %217 : vector<32x256xf32>
    %cst_155 = arith.constant -2.09993368E-6 : f32
    %235 = vector.broadcast %cst_155 : f32 to vector<32x256xf32>
    %236 = arith.mulf %235, %222 : vector<32x256xf32>
    %237 = arith.addf %234, %236 : vector<32x256xf32>
    %cst_156 = arith.constant 0.0128061865 : f32
    %238 = vector.broadcast %cst_156 : f32 to vector<32x256xf32>
    %239 = arith.mulf %238, %232 : vector<32x256xf32>
    %240 = arith.addf %237, %239 : vector<32x256xf32>
    %c0_157 = arith.constant 0 : index
    %c1_158 = arith.constant 1 : index
    %c0_159 = arith.constant 0 : index
    %c0_160 = arith.constant 0 : index
    %241 = vector.load %arg7[%c0_157, %c1_158, %c0_159, %c0_160] : memref<2x4x32x256xf32, #tpu.memory_space<vmem>>, vector<1x1x32x256xf32>
    %242 = vector.shape_cast %241 : vector<1x1x32x256xf32> to vector<32x256xf32>
    %cst_161 = arith.constant 9.99969488E-5 : f32
    %243 = vector.broadcast %cst_161 : f32 to vector<32x256xf32>
    %244 = arith.mulf %243, %242 : vector<32x256xf32>
    %245 = arith.addf %240, %244 : vector<32x256xf32>
    %c0_162 = arith.constant 0 : index
    %c3_163 = arith.constant 3 : index
    %c0_164 = arith.constant 0 : index
    %c0_165 = arith.constant 0 : index
    %246 = vector.load %arg7[%c0_162, %c3_163, %c0_164, %c0_165] : memref<2x4x32x256xf32, #tpu.memory_space<vmem>>, vector<1x1x32x256xf32>
    %247 = vector.shape_cast %246 : vector<1x1x32x256xf32> to vector<32x256xf32>
    %cst_166 = arith.constant 0.0128076272 : f32
    %248 = vector.broadcast %cst_166 : f32 to vector<32x256xf32>
    %249 = arith.mulf %248, %247 : vector<32x256xf32>
    %250 = arith.addf %245, %249 : vector<32x256xf32>
    %251 = arith.subf %214, %250 : vector<32x256xf32>
    %252 = arith.mulf %251, %7 : vector<32x256xf32>
    %253 = arith.addf %250, %252 : vector<32x256xf32>
    %254 = arith.truncf %253 : vector<32x256xf32> to vector<32x256xbf16>
    %cst_167 = arith.constant dense<0.000000e+00> : vector<32x256xf32>
    %255 = tpu.matmul %203, %254, %cst_167 {dimension_numbers = #tpu.dot_dimension_numbers<[1], [0], [0], [1], [0, 0, 1, 1], [], []>} : vector<32x32xbf16>, vector<32x256xbf16>, vector<32x256xf32> -> vector<32x256xf32>
    %256 = vector.broadcast %207 : vector<32x1xf32> to vector<32x256xf32>
    %257 = arith.addf %255, %256 : vector<32x256xf32>
    %258 = math.tanh %257 : vector<32x256xf32>
    %cst_168 = arith.constant 0.999672114 : f32
    %259 = vector.broadcast %cst_168 : f32 to vector<32x256xf32>
    %260 = arith.mulf %259, %253 : vector<32x256xf32>
    %cst_169 = arith.constant 0.00640151835 : f32
    %261 = vector.broadcast %cst_169 : f32 to vector<32x256xf32>
    %262 = arith.mulf %261, %258 : vector<32x256xf32>
    %263 = arith.addf %260, %262 : vector<32x256xf32>
    %264 = arith.truncf %263 : vector<32x256xf32> to vector<32x256xbf16>
    %cst_170 = arith.constant dense<0.000000e+00> : vector<32x256xf32>
    %265 = tpu.matmul %205, %264, %cst_170 {dimension_numbers = #tpu.dot_dimension_numbers<[1], [0], [0], [1], [0, 0, 1, 1], [], []>} : vector<32x32xbf16>, vector<32x256xbf16>, vector<32x256xf32> -> vector<32x256xf32>
    %266 = vector.broadcast %209 : vector<32x1xf32> to vector<32x256xf32>
    %267 = arith.addf %265, %266 : vector<32x256xf32>
    %268 = math.tanh %267 : vector<32x256xf32>
    %cst_171 = arith.constant 0.999672055 : f32
    %269 = vector.broadcast %cst_171 : f32 to vector<32x256xf32>
    %270 = arith.mulf %269, %253 : vector<32x256xf32>
    %cst_172 = arith.constant -2.09993368E-6 : f32
    %271 = vector.broadcast %cst_172 : f32 to vector<32x256xf32>
    %272 = arith.mulf %271, %258 : vector<32x256xf32>
    %273 = arith.addf %270, %272 : vector<32x256xf32>
    %cst_173 = arith.constant 0.0128061865 : f32
    %274 = vector.broadcast %cst_173 : f32 to vector<32x256xf32>
    %275 = arith.mulf %274, %268 : vector<32x256xf32>
    %276 = arith.addf %273, %275 : vector<32x256xf32>
    %c0_174 = arith.constant 0 : index
    %c2_175 = arith.constant 2 : index
    %c0_176 = arith.constant 0 : index
    %c0_177 = arith.constant 0 : index
    %277 = vector.load %arg7[%c0_174, %c2_175, %c0_176, %c0_177] : memref<2x4x32x256xf32, #tpu.memory_space<vmem>>, vector<1x1x32x256xf32>
    %278 = vector.shape_cast %277 : vector<1x1x32x256xf32> to vector<32x256xf32>
    %cst_178 = arith.constant 9.99969488E-5 : f32
    %279 = vector.broadcast %cst_178 : f32 to vector<32x256xf32>
    %280 = arith.mulf %279, %278 : vector<32x256xf32>
    %281 = arith.addf %276, %280 : vector<32x256xf32>
    %282 = arith.subf %6, %281 : vector<32x256xf32>
    %283 = arith.mulf %282, %7 : vector<32x256xf32>
    %284 = arith.addf %281, %283 : vector<32x256xf32>
    %c0_179 = arith.constant 0 : index
    %c0_180 = arith.constant 0 : index
    %285 = vector.load %arg6[%c0_179, %c0_180] : memref<32x256xf32, #tpu.memory_space<vmem>>, vector<32x256xf32>
    tpu.vector_store %arg6[%c0_179, %c0_180], %284 {strides = array<i32>} : memref<32x256xf32, #tpu.memory_space<vmem>>, vector<32x256xf32>,
    return
  }
}

</mosaic_0001>

<llo_original>
// kernel: diffusion_inpaint.1
$region0: #{diffusion_inpaint.1}
  #allocation0 [shape = 'u32[]', space=smem, size = 0x4, offset = 0x4, fixed_abs, tag = 'smem constant byte address 0x4 - core index']
  #allocation1 [shape = 'u32[144,128]{1,0:T(1,128)}', space=vmem, size = 0x12000, scoped, tag = 'internal scratch']
  #allocation2 [shape = 'f32[2,4,32,256]{3,2,1,0:T(8,128)}', space=vmem, size = 0x40000, scoped, tag = 'scratch operand']
  #allocation3 [shape = 's32[2]{0}', space=sflag, size = 0x8, scoped, tag = 'scratch operand']
  #allocation4 [shape = 's32[]', space=sflag, size = 0x4, offset = 0, fixed_abs, tag = 'sflag constant byte address 0x0 - dummy sync flag']
  #allocation5 [shape = 's32[]', space=sflag, size = 0x4, offset = 0, fixed_abs, tag = 'sflag constant byte address 0x0 - dummy sync flag']
  #allocation6 [shape = 'u32[]', space=smem, size = 0x4, offset = 0x44, fixed_abs, tag = 'smem constant byte address 0x44 - assertion arg 0']
  #allocation7 [shape = 'u32[]', space=smem, size = 0x4, offset = 0x48, fixed_abs, tag = 'smem constant byte address 0x48 - assertion arg 1']
  #allocation8 [shape = 's32[]', space=sflag, size = 0x4, offset = 0, fixed_abs, tag = 'sflag constant byte address 0x0 - dummy sync flag']
  #allocation9 [shape = 's32[]', space=sflag, size = 0x4, offset = 0, fixed_abs, tag = 'sflag constant byte address 0x0 - dummy sync flag']
  #allocation10 [shape = 's32[]', space=sflag, size = 0x4, offset = 0, fixed_abs, tag = 'sflag constant byte address 0x0 - dummy sync flag']
  #allocation11 [shape = 's32[]', space=sflag, size = 0x4, offset = 0, fixed_abs, tag = 'sflag constant byte address 0x0 - dummy sync flag']
  %s0 = inlined_call_operand.vmem [shape: bf16[6,32,32], index: 0, kind: input, shape index: {}]
  %s1 = inlined_call_operand.vmem [shape: f32[32,1], index: 1, kind: input, shape index: {}]
  %s2 = inlined_call_operand.vmem [shape: f32[32,256], index: 2, kind: input, shape index: {}]
  %s3 = inlined_call_operand.vmem [shape: f32[32,256], index: 3, kind: input, shape index: {}]
  %s4 = inlined_call_operand.vmem [shape: f32[32,256], index: 4, kind: input, shape index: {}]
  %s5 = inlined_call_operand.hbm [shape: f32[3,4,32,256], index: 5, kind: input, shape index: {}]
  %s6 = inlined_call_operand.vmem [shape: f32[32,256], index: 6, kind: output, shape index: {}]
  %s7 = sld [smem:[#allocation0]]
  $region42: #{diffusion_inpaint.1} parent=0
    _
  %s9 = ssub.s32 1, %s7
  %s10 = scalar_select 0, %s9, %s7
  // Predicated region
  $region2: #{diffusion_inpaint.1} parent=0 // pred_check
    _
  $region3: #{diffusion_inpaint.1} parent=0 // pred_check_branch
    %12 = sbr.rel (0) target = $region5
  $region4: #{diffusion_inpaint.1} parent=0 // pred_region
    _
  $region5: #{diffusion_inpaint.1} parent=0 // pred_fallthru
    _
  // Predicated region
  $region6: #{diffusion_inpaint.1} parent=0 // pred_check
    _
  $region7: #{diffusion_inpaint.1} parent=0 // pred_check_branch
    %14 = sbr.rel (0) target = $region9
  $region8: #{diffusion_inpaint.1} parent=0 // pred_region
    _
  $region9: #{diffusion_inpaint.1} parent=0 // pred_fallthru
    _
  // Predicated region
  $region10: #{diffusion_inpaint.1} parent=0 // pred_check
    _
  $region11: #{diffusion_inpaint.1} parent=0 // pred_check_branch
    %16 = sbr.rel (0) target = $region13
  $region12: #{diffusion_inpaint.1} parent=0 // pred_region
    _
  $region13: #{diffusion_inpaint.1} parent=0 // pred_fallthru
    _
  // Predicated region
  $region14: #{diffusion_inpaint.1} parent=0 // pred_check
    _
  $region15: #{diffusion_inpaint.1} parent=0 // pred_check_branch
    %18 = sbr.rel (0) target = $region17
  $region16: #{diffusion_inpaint.1} parent=0 // pred_region
    _
  $region17: #{diffusion_inpaint.1} parent=0 // pred_fallthru
    _
  // Predicated region
  $region18: #{diffusion_inpaint.1} parent=0 // pred_check
    _
  $region19: #{diffusion_inpaint.1} parent=0 // pred_check_branch
    %20 = sbr.rel (0) target = $region21
  $region20: #{diffusion_inpaint.1} parent=0 // pred_region
    _
  $region21: #{diffusion_inpaint.1} parent=0 // pred_fallthru
    _
  // Predicated region
  $region22: #{diffusion_inpaint.1} parent=0 // pred_check
    _
  $region23: #{diffusion_inpaint.1} parent=0 // pred_check_branch
    %23 = sbr.rel target = $region25
  $region24: #{diffusion_inpaint.1} parent=0 // pred_region
    %24 = sst [smem:[#allocation6]] [#allocation5]
    %25 = sst [smem:[#allocation7]] [#allocation4]
  $region25: #{diffusion_inpaint.1} parent=0 // pred_fallthru
    _
  %27 = shalt.err (0)
  %s29 = sshll.u32 [#allocation2], 4
  %s30 = int_to_ptr.vmem [resolvable:$true] %s29
  %32 = dma.hbm_to_vmem [thread:$0]  %s5, 4096, %s30, [#allocation3]
  %v33 = vld [vmem:[%s2] sm:$0xff]
  %v34 = vld [vmem:[%s2 + $0x8] sm:$0xff]
  %v35 = vld [vmem:[%s2 + $0x10] sm:$0xff]
  %v36 = vld [vmem:[%s2 + $0x18] sm:$0xff]
  %v37 = vld [vmem:[%s2 + $0x20] sm:$0xff]
  %v38 = vld [vmem:[%s2 + $0x28] sm:$0xff]
  %v39 = vld [vmem:[%s2 + $0x30] sm:$0xff]
  %v40 = vld [vmem:[%s2 + $0x38] sm:$0xff]
  %v41 = vld [vmem:[%s3] sm:$0xff]
  %v42 = vld [vmem:[%s3 + $0x8] sm:$0xff]
  %v43 = vld [vmem:[%s3 + $0x10] sm:$0xff]
  %v44 = vld [vmem:[%s3 + $0x18] sm:$0xff]
  %v45 = vld [vmem:[%s3 + $0x20] sm:$0xff]
  %v46 = vld [vmem:[%s3 + $0x28] sm:$0xff]
  %v47 = vld [vmem:[%s3 + $0x30] sm:$0xff]
  %v48 = vld [vmem:[%s3 + $0x38] sm:$0xff]
  %v49 = vld [vmem:[%s1] sm:$0xff]
  %v50 = vld [vmem:[%s1 + $0x8] sm:$0xff]
  %v51 = vld [vmem:[%s1 + $0x10] sm:$0xff]
  %v52 = vld [vmem:[%s1 + $0x18] sm:$0xff]
  %v53 = vld [vmem:[%s4] sm:$0xff]
  %v54 = vld [vmem:[%s4 + $0x8] sm:$0xff]
  %v55 = vld [vmem:[%s4 + $0x10] sm:$0xff]
  %v56 = vld [vmem:[%s4 + $0x18] sm:$0xff]
  %v57 = vld [vmem:[%s4 + $0x20] sm:$0xff]
  %v58 = vld [vmem:[%s4 + $0x28] sm:$0xff]
  %v59 = vld [vmem:[%s4 + $0x30] sm:$0xff]
  %v60 = vld [vmem:[%s4 + $0x38] sm:$0xff]
  %v61 = vmul.f32 %v53, 3.0
  %v62 = vmul.f32 %v54, 3.0
  %v63 = vmul.f32 %v55, 3.0
  %v64 = vmul.f32 %v56, 3.0
  %v65 = vmul.f32 %v57, 3.0
  %v66 = vmul.f32 %v58, 3.0
  %v67 = vmul.f32 %v59, 3.0
  %v68 = vmul.f32 %v60, 3.0
  %s69 = smul.u32 8, 4
  %s70 = smul.u32 %s69, 4
  %s71 = smul.u32 %s70, 2
  %s72 = sshll.u32 %s71, 4
  %73 = dma.done [#allocation3], %s72
  %s74 = scalar_lea.hbm %s5, 4096
  %s75 = scalar_lea.vmem [#allocation2], 256
  %s76 = scalar_lea.sflag [#allocation3], 1
  // Predicated region
  $region26: #{diffusion_inpaint.1} parent=0 // pred_check
    _
  $region27: #{diffusion_inpaint.1} parent=0 // pred_check_branch
    %78 = sbr.rel target = $region29
  $region28: #{diffusion_inpaint.1} parent=0 // pred_region
    %79 = sst [smem:[#allocation6]] [#allocation9]
    %80 = sst [smem:[#allocation7]] [#allocation8]
  $region29: #{diffusion_inpaint.1} parent=0 // pred_fallthru
    _
  %82 = shalt.err (0)
  %s84 = sshll.u32 %s75, 4
  %s85 = int_to_ptr.vmem [resolvable:$true] %s84
  %87 = dma.hbm_to_vmem [thread:$0]  %s74, 4096, %s85, %s76
  %v88 = vld [vmem:[%s0] sm:$0xf]
  %v89 = vld [vmem:[%s0 + $0x4] sm:$0xf]
  %v90 = vld [vmem:[%s0 + $0x8] sm:$0xf]
  %v91 = vld [vmem:[%s0 + $0xc] sm:$0xf]
  %s92 = scalar_lea.vmem %s0, 16
  %v93 = vld [vmem:[%s92] sm:$0xf]
  %v94 = vld [vmem:[%s92 + $0x4] sm:$0xf]
  %v95 = vld [vmem:[%s92 + $0x8] sm:$0xf]
  %v96 = vld [vmem:[%s92 + $0xc] sm:$0xf]
  %v97 = vmul.f32 %v49, 0.27465308
  %v98 = vmul.f32 %v50, 0.27465308
  %v99 = vmul.f32 %v51, 0.27465308
  %v100 = vmul.f32 %v52, 0.27465308
  %v101 = vmul.f32 %v49, 0.1037651
  %v102 = vmul.f32 %v50, 0.1037651
  %v103 = vmul.f32 %v51, 0.1037651
  %v104 = vmul.f32 %v52, 0.1037651
  %v105 = vld [vmem:[#allocation2] sm:$0xff]
  %v106 = vld [vmem:[#allocation2 + $0x8] sm:$0xff]
  %v107 = vld [vmem:[#allocation2 + $0x10] sm:$0xff]
  %v108 = vld [vmem:[#allocation2 + $0x18] sm:$0xff]
  %v109 = vld [vmem:[#allocation2 + $0x20] sm:$0xff]
  %v110 = vld [vmem:[#allocation2 + $0x28] sm:$0xff]
  %v111 = vld [vmem:[#allocation2 + $0x30] sm:$0xff]
  %v112 = vld [vmem:[#allocation2 + $0x38] sm:$0xff]
  %v113 = vmul.f32 %v105, 3.0
  %v114 = vmul.f32 %v106, 3.0
  %v115 = vmul.f32 %v107, 3.0
  %v116 = vmul.f32 %v108, 3.0
  %v117 = vmul.f32 %v109, 3.0
  %v118 = vmul.f32 %v110, 3.0
  %v119 = vmul.f32 %v111, 3.0
  %v120 = vmul.f32 %v112, 3.0
  %v121 = vadd.f32 %v33, %v113
  %v122 = vadd.f32 %v34, %v114
  %v123 = vadd.f32 %v35, %v115
  %v124 = vadd.f32 %v36, %v116
  %v125 = vadd.f32 %v37, %v117
  %v126 = vadd.f32 %v38, %v118
  %v127 = vadd.f32 %v39, %v119
  %v128 = vadd.f32 %v40, %v120
  %v129 = vsub.f32 %v121, %v61
  %v130 = vsub.f32 %v122, %v62
  %v131 = vsub.f32 %v123, %v63
  %v132 = vsub.f32 %v124, %v64
  %v133 = vsub.f32 %v125, %v65
  %v134 = vsub.f32 %v126, %v66
  %v135 = vsub.f32 %v127, %v67
  %v136 = vsub.f32 %v128, %v68
  %v137 = vmul.f32 %v129, %v41
  %v138 = vmul.f32 %v130, %v42
  %v139 = vmul.f32 %v131, %v43
  %v140 = vmul.f32 %v132, %v44
  %v141 = vmul.f32 %v133, %v45
  %v142 = vmul.f32 %v134, %v46
  %v143 = vmul.f32 %v135, %v47
  %v144 = vmul.f32 %v136, %v48
  %v145 = vadd.f32 %v61, %v137
  %v146 = vadd.f32 %v62, %v138
  %v147 = vadd.f32 %v63, %v139
  %v148 = vadd.f32 %v64, %v140
  %v149 = vadd.f32 %v65, %v141
  %v150 = vadd.f32 %v66, %v142
  %v151 = vadd.f32 %v67, %v143
  %v152 = vadd.f32 %v68, %v144
  %v153 = vpack.c.bf16 %v147, %v145
  %v154 = vpack.c.bf16 %v148, %v146
  %v155 = vpack.c.bf16 %v151, %v149
  %v156 = vpack.c.bf16 %v152, %v150
  %158 = vset.pattern.permute.xlu0 0
  %159 = vperm.xlu0 %158, %v97
  %v160 = vpop.permute.xlu0 %159
  %163 = vset.pattern.permute.xlu0 0
  %164 = vperm.xlu0 %163, %v98
  %v165 = vpop.permute.xlu0 %164
  %168 = vset.pattern.permute.xlu0 0
  %169 = vperm.xlu0 %168, %v99
  %v170 = vpop.permute.xlu0 %169
  %173 = vset.pattern.permute.xlu0 0
  %174 = vperm.xlu0 %173, %v100
  %v175 = vpop.permute.xlu0 %174
  %v181 = vunpack.c.l.b16 %v88
  %v182 = vunpack.c.l.b16 %v89
  %v183 = vunpack.c.l.b16 %v90
  %v184 = vunpack.c.l.b16 %v91
  %v185 = vpack.c.b16 %v182, %v181
  %v186 = vpack.c.b16 %v184, %v183
  %vm187 = vcmask 261120
  %v189 = vsel %vm187, %v185, 0
  %v192 = vsel %vm187, %v186, 0
  %194 = vmatprep.subr.bf16.mxu0 %v154
  %195 = vmatpush1.bf16.msra.mxu0 %v153
  %196 = vmatprep.subr.bf16.mxu0 %v156
  %197 = vmatpush1.bf16.msra.mxu0 %v155
  %198 = vmatprep.subr.bf16.mxu0 0
  %199 = vmatpush1.bf16.msra.mxu0 0
  %200 = vmatprep.subr.bf16.mxu0 0
  %201 = vmatpush1.bf16.msra.mxu0 0
  %202 = vmatprep.subr.bf16.mxu0 0
  %203 = vmatpush1.bf16.msra.mxu0 0
  %204 = vmatprep.subr.bf16.mxu0 0
  %205 = vmatpush1.bf16.msra.mxu0 0
  %206 = vmatprep.subr.bf16.mxu0 0
  %207 = vmatpush1.bf16.msra.mxu0 0
  %208 = vmatprep.subr.bf16.mxu0 0
  %209 = vmatpush1.bf16.msra.mxu0 0
  %210 = vmatprep.subr.bf16.mxu0 0
  %211 = vmatpush1.bf16.msra.mxu0 0
  %212 = vmatprep.subr.bf16.mxu0 0
  %213 = vmatpush1.bf16.msra.mxu0 0
  %214 = vmatprep.subr.bf16.mxu0 0
  %215 = vmatpush1.bf16.msra.mxu0 0
  %216 = vmatprep.subr.bf16.mxu0 0
  %217 = vmatpush1.bf16.msra.mxu0 0
  %218 = vmatprep.subr.bf16.mxu0 0
  %219 = vmatpush1.bf16.msra.mxu0 0
  %220 = vmatprep.subr.bf16.mxu0 0
  %221 = vmatpush1.bf16.msra.mxu0 0
  %222 = vmatprep.subr.bf16.mxu0 0
  %223 = vmatpush1.bf16.msra.mxu0 0
  %224 = vmatprep.subr.bf16.mxu0 0
  %225 = vmatpush1.bf16.msra.mxu0 0
  %226 = vmatprep.mubr.bf16.mxu0 0
  %227 = vmatmul.mubr.bf16.gmra.mrb[0].mxu0 %v189
  %v228 = vpop.f32.mrb[0].mxu0
  %v229 = vadd.f32 %v160, %v228
  %v230 = vpop.f32.mrb[0].mxu0
  %v231 = vadd.f32 %v160, %v230
  %v232 = vpop.f32.mrb[0].mxu0
  %v233 = vadd.f32 %v165, %v232
  %v234 = vpop.f32.mrb[0].mxu0
  %v235 = vadd.f32 %v165, %v234
  %236 = vmatprep.mubr.bf16.mxu0 0
  %237 = vmatmul.mubr.bf16.gmra.mrb[0].mxu0 %v192
  %v238 = vpop.f32.mrb[0].mxu0
  %v239 = vadd.f32 %v170, %v238
  %v240 = vpop.f32.mrb[0].mxu0
  %v241 = vadd.f32 %v170, %v240
  %v242 = vpop.f32.mrb[0].mxu0
  %v243 = vadd.f32 %v175, %v242
  %v244 = vpop.f32.mrb[0].mxu0
  %v245 = vadd.f32 %v175, %v244
  %246 = vdwg.mxu0
  %v247 = vtanh.pop %v229
  %v248 = vtanh.pop %v231
  %v249 = vtanh.pop %v233
  %v250 = vtanh.pop %v235
  %v251 = vtanh.pop %v239
  %v252 = vtanh.pop %v241
  %v253 = vtanh.pop %v243
  %v254 = vtanh.pop %v245
  %v255 = vmul.f32 %v145, 0.518204
  %v256 = vmul.f32 %v146, 0.518204
  %v257 = vmul.f32 %v147, 0.518204
  %v258 = vmul.f32 %v148, 0.518204
  %v259 = vmul.f32 %v149, 0.518204
  %v260 = vmul.f32 %v150, 0.518204
  %v261 = vmul.f32 %v151, 0.518204
  %v262 = vmul.f32 %v152, 0.518204
  %v263 = vmul.f32 %v247, 0.24422091
  %v264 = vmul.f32 %v248, 0.24422091
  %v265 = vmul.f32 %v249, 0.24422091
  %v266 = vmul.f32 %v250, 0.24422091
  %v267 = vmul.f32 %v251, 0.24422091
  %v268 = vmul.f32 %v252, 0.24422091
  %v269 = vmul.f32 %v253, 0.24422091
  %v270 = vmul.f32 %v254, 0.24422091
  %v271 = vadd.f32 %v255, %v263
  %v272 = vadd.f32 %v256, %v264
  %v273 = vadd.f32 %v257, %v265
  %v274 = vadd.f32 %v258, %v266
  %v275 = vadd.f32 %v259, %v267
  %v276 = vadd.f32 %v260, %v268
  %v277 = vadd.f32 %v261, %v269
  %v278 = vadd.f32 %v262, %v270
  %v279 = vpack.c.bf16 %v273, %v271
  %v280 = vpack.c.bf16 %v274, %v272
  %v281 = vpack.c.bf16 %v277, %v275
  %v282 = vpack.c.bf16 %v278, %v276
  %284 = vset.pattern.permute.xlu0 0
  %285 = vperm.xlu0 %284, %v101
  %v286 = vpop.permute.xlu0 %285
  %289 = vset.pattern.permute.xlu0 0
  %290 = vperm.xlu0 %289, %v102
  %v291 = vpop.permute.xlu0 %290
  %294 = vset.pattern.permute.xlu0 0
  %295 = vperm.xlu0 %294, %v103
  %v296 = vpop.permute.xlu0 %295
  %299 = vset.pattern.permute.xlu0 0
  %300 = vperm.xlu0 %299, %v104
  %v301 = vpop.permute.xlu0 %300
  %v307 = vunpack.c.l.b16 %v93
  %v308 = vunpack.c.l.b16 %v94
  %v309 = vunpack.c.l.b16 %v95
  %v310 = vunpack.c.l.b16 %v96
  %v311 = vpack.c.b16 %v308, %v307
  %v312 = vpack.c.b16 %v310, %v309
  %v314 = vsel %vm187, %v311, 0
  %v317 = vsel %vm187, %v312, 0
  %319 = vmatprep.subr.bf16.mxu0 %v280
  %320 = vmatpush1.bf16.msra.mxu0 %v279
  %321 = vmatprep.subr.bf16.mxu0 %v282
  %322 = vmatpush1.bf16.msra.mxu0 %v281
  %323 = vmatprep.subr.bf16.mxu0 0
  %324 = vmatpush1.bf16.msra.mxu0 0
  %325 = vmatprep.subr.bf16.mxu0 0
  %326 = vmatpush1.bf16.msra.mxu0 0
  %327 = vmatprep.subr.bf16.mxu0 0
  %328 = vmatpush1.bf16.msra.mxu0 0
  %329 = vmatprep.subr.bf16.mxu0 0
  %330 = vmatpush1.bf16.msra.mxu0 0
  %331 = vmatprep.subr.bf16.mxu0 0
  %332 = vmatpush1.bf16.msra.mxu0 0
  %333 = vmatprep.subr.bf16.mxu0 0
  %334 = vmatpush1.bf16.msra.mxu0 0
  %335 = vmatprep.subr.bf16.mxu0 0
  %336 = vmatpush1.bf16.msra.mxu0 0
  %337 = vmatprep.subr.bf16.mxu0 0
  %338 = vmatpush1.bf16.msra.mxu0 0
  %339 = vmatprep.subr.bf16.mxu0 0
  %340 = vmatpush1.bf16.msra.mxu0 0
  %341 = vmatprep.subr.bf16.mxu0 0
  %342 = vmatpush1.bf16.msra.mxu0 0
  %343 = vmatprep.subr.bf16.mxu0 0
  %344 = vmatpush1.bf16.msra.mxu0 0
  %345 = vmatprep.subr.bf16.mxu0 0
  %346 = vmatpush1.bf16.msra.mxu0 0
  %347 = vmatprep.subr.bf16.mxu0 0
  %348 = vmatpush1.bf16.msra.mxu0 0
  %349 = vmatprep.subr.bf16.mxu0 0
  %350 = vmatpush1.bf16.msra.mxu0 0
  %351 = vmatprep.mubr.bf16.mxu0 0
  %352 = vmatmul.mubr.bf16.gmra.mrb[0].mxu0 %v314
  %v353 = vpop.f32.mrb[0].mxu0
  %v354 = vadd.f32 %v286, %v353
  %v355 = vpop.f32.mrb[0].mxu0
  %v356 = vadd.f32 %v286, %v355
  %v357 = vpop.f32.mrb[0].mxu0
  %v358 = vadd.f32 %v291, %v357
  %v359 = vpop.f32.mrb[0].mxu0
  %v360 = vadd.f32 %v291, %v359
  %361 = vmatprep.mubr.bf16.mxu0 0
  %362 = vmatmul.mubr.bf16.gmra.mrb[0].mxu0 %v317
  %v363 = vpop.f32.mrb[0].mxu0
  %v364 = vadd.f32 %v296, %v363
  %v365 = vpop.f32.mrb[0].mxu0
  %v366 = vadd.f32 %v296, %v365
  %v367 = vpop.f32.mrb[0].mxu0
  %v368 = vadd.f32 %v301, %v367
  %v369 = vpop.f32.mrb[0].mxu0
  %v370 = vadd.f32 %v301, %v369
  %371 = vdwg.mxu0
  %v372 = vtanh.pop %v354
  %v373 = vtanh.pop %v356
  %v374 = vtanh.pop %v358
  %v375 = vtanh.pop %v360
  %v376 = vtanh.pop %v364
  %v377 = vtanh.pop %v366
  %v378 = vtanh.pop %v368
  %v379 = vtanh.pop %v370
  %v380 = vmul.f32 %v145, 0.08330519
  %v381 = vmul.f32 %v146, 0.08330519
  %v382 = vmul.f32 %v147, 0.08330519
  %v383 = vmul.f32 %v148, 0.08330519
  %v384 = vmul.f32 %v149, 0.08330519
  %v385 = vmul.f32 %v150, 0.08330519
  %v386 = vmul.f32 %v151, 0.08330519
  %v387 = vmul.f32 %v152, 0.08330519
  %v388 = vmul.f32 %v247, -0.43202302
  %v389 = vmul.f32 %v248, -0.43202302
  %v390 = vmul.f32 %v249, -0.43202302
  %v391 = vmul.f32 %v250, -0.43202302
  %v392 = vmul.f32 %v251, -0.43202302
  %v393 = vmul.f32 %v252, -0.43202302
  %v394 = vmul.f32 %v253, -0.43202302
  %v395 = vmul.f32 %v254, -0.43202302
  %v396 = vadd.f32 %v380, %v388
  %v397 = vadd.f32 %v381, %v389
  %v398 = vadd.f32 %v382, %v390
  %v399 = vadd.f32 %v383, %v391
  %v400 = vadd.f32 %v384, %v392
  %v401 = vadd.f32 %v385, %v393
  %v402 = vadd.f32 %v386, %v394
  %v403 = vadd.f32 %v387, %v395
  %v404 = vmul.f32 %v372, 0.93145025
  %v405 = vmul.f32 %v373, 0.93145025
  %v406 = vmul.f32 %v374, 0.93145025
  %v407 = vmul.f32 %v375, 0.93145025
  %v408 = vmul.f32 %v376, 0.93145025
  %v409 = vmul.f32 %v377, 0.93145025
  %v410 = vmul.f32 %v378, 0.93145025
  %v411 = vmul.f32 %v379, 0.93145025
  %v412 = vadd.f32 %v396, %v404
  %v413 = vadd.f32 %v397, %v405
  %v414 = vadd.f32 %v398, %v406
  %v415 = vadd.f32 %v399, %v407
  %v416 = vadd.f32 %v400, %v408
  %v417 = vadd.f32 %v401, %v409
  %v418 = vadd.f32 %v402, %v410
  %v419 = vadd.f32 %v403, %v411
  %s420 = scalar_lea.vmem [#allocation2], 64
  %v421 = vld [vmem:[%s420] sm:$0xff]
  %v422 = vld [vmem:[%s420 + $0x8] sm:$0xff]
  %v423 = vld [vmem:[%s420 + $0x10] sm:$0xff]
  %v424 = vld [vmem:[%s420 + $0x18] sm:$0xff]
  %v425 = vld [vmem:[%s420 + $0x20] sm:$0xff]
  %v426 = vld [vmem:[%s420 + $0x28] sm:$0xff]
  %v427 = vld [vmem:[%s420 + $0x30] sm:$0xff]
  %v428 = vld [vmem:[%s420 + $0x38] sm:$0xff]
  %v429 = vmul.f32 %v421, 0.2931494
  %v430 = vmul.f32 %v422, 0.2931494
  %v431 = vmul.f32 %v423, 0.2931494
  %v432 = vmul.f32 %v424, 0.2931494
  %v433 = vmul.f32 %v425, 0.2931494
  %v434 = vmul.f32 %v426, 0.2931494
  %v435 = vmul.f32 %v427, 0.2931494
  %v436 = vmul.f32 %v428, 0.2931494
  %v437 = vadd.f32 %v412, %v429
  %v438 = vadd.f32 %v413, %v430
  %v439 = vadd.f32 %v414, %v431
  %v440 = vadd.f32 %v415, %v432
  %v441 = vadd.f32 %v416, %v433
  %v442 = vadd.f32 %v417, %v434
  %v443 = vadd.f32 %v418, %v435
  %v444 = vadd.f32 %v419, %v436
  %s445 = scalar_lea.vmem [#allocation2], 192
  %v446 = vld [vmem:[%s445] sm:$0xff]
  %v447 = vld [vmem:[%s445 + $0x8] sm:$0xff]
  %v448 = vld [vmem:[%s445 + $0x10] sm:$0xff]
  %v449 = vld [vmem:[%s445 + $0x18] sm:$0xff]
  %v450 = vld [vmem:[%s445 + $0x20] sm:$0xff]
  %v451 = vld [vmem:[%s445 + $0x28] sm:$0xff]
  %v452 = vld [vmem:[%s445 + $0x30] sm:$0xff]
  %v453 = vld [vmem:[%s445 + $0x38] sm:$0xff]
  %v454 = vmul.f32 %v446, 2.9855027
  %v455 = vmul.f32 %v447, 2.9855027
  %v456 = vmul.f32 %v448, 2.9855027
  %v457 = vmul.f32 %v449, 2.9855027
  %v458 = vmul.f32 %v450, 2.9855027
  %v459 = vmul.f32 %v451, 2.9855027
  %v460 = vmul.f32 %v452, 2.9855027
  %v461 = vmul.f32 %v453, 2.9855027
  %v462 = vadd.f32 %v437, %v454
  %v463 = vadd.f32 %v438, %v455
  %v464 = vadd.f32 %v439, %v456
  %v465 = vadd.f32 %v440, %v457
  %v466 = vadd.f32 %v441, %v458
  %v467 = vadd.f32 %v442, %v459
  %v468 = vadd.f32 %v443, %v460
  %v469 = vadd.f32 %v444, %v461
  %v470 = vsub.f32 %v121, %v462
  %v471 = vsub.f32 %v122, %v463
  %v472 = vsub.f32 %v123, %v464
  %v473 = vsub.f32 %v124, %v465
  %v474 = vsub.f32 %v125, %v466
  %v475 = vsub.f32 %v126, %v467
  %v476 = vsub.f32 %v127, %v468
  %v477 = vsub.f32 %v128, %v469
  %v478 = vmul.f32 %v470, %v41
  %v479 = vmul.f32 %v471, %v42
  %v480 = vmul.f32 %v472, %v43
  %v481 = vmul.f32 %v473, %v44
  %v482 = vmul.f32 %v474, %v45
  %v483 = vmul.f32 %v475, %v46
  %v484 = vmul.f32 %v476, %v47
  %v485 = vmul.f32 %v477, %v48
  %v486 = vadd.f32 %v462, %v478
  %v487 = vadd.f32 %v463, %v479
  %v488 = vadd.f32 %v464, %v480
  %v489 = vadd.f32 %v465, %v481
  %v490 = vadd.f32 %v466, %v482
  %v491 = vadd.f32 %v467, %v483
  %v492 = vadd.f32 %v468, %v484
  %v493 = vadd.f32 %v469, %v485
  %v494 = vpack.c.bf16 %v488, %v486
  %v495 = vpack.c.bf16 %v489, %v487
  %v496 = vpack.c.bf16 %v492, %v490
  %v497 = vpack.c.bf16 %v493, %v491
  %498 = vmatprep.subr.bf16.mxu0 %v495
  %499 = vmatpush1.bf16.msra.mxu0 %v494
  %500 = vmatprep.subr.bf16.mxu0 %v497
  %501 = vmatpush1.bf16.msra.mxu0 %v496
  %502 = vmatprep.subr.bf16.mxu0 0
  %503 = vmatpush1.bf16.msra.mxu0 0
  %504 = vmatprep.subr.bf16.mxu0 0
  %505 = vmatpush1.bf16.msra.mxu0 0
  %506 = vmatprep.subr.bf16.mxu0 0
  %507 = vmatpush1.bf16.msra.mxu0 0
  %508 = vmatprep.subr.bf16.mxu0 0
  %509 = vmatpush1.bf16.msra.mxu0 0
  %510 = vmatprep.subr.bf16.mxu0 0
  %511 = vmatpush1.bf16.msra.mxu0 0
  %512 = vmatprep.subr.bf16.mxu0 0
  %513 = vmatpush1.bf16.msra.mxu0 0
  %514 = vmatprep.subr.bf16.mxu0 0
  %515 = vmatpush1.bf16.msra.mxu0 0
  %516 = vmatprep.subr.bf16.mxu0 0
  %517 = vmatpush1.bf16.msra.mxu0 0
  %518 = vmatprep.subr.bf16.mxu0 0
  %519 = vmatpush1.bf16.msra.mxu0 0
  %520 = vmatprep.subr.bf16.mxu0 0
  %521 = vmatpush1.bf16.msra.mxu0 0
  %522 = vmatprep.subr.bf16.mxu0 0
  %523 = vmatpush1.bf16.msra.mxu0 0
  %524 = vmatprep.subr.bf16.mxu0 0
  %525 = vmatpush1.bf16.msra.mxu0 0
  %526 = vmatprep.subr.bf16.mxu0 0
  %527 = vmatpush1.bf16.msra.mxu0 0
  %528 = vmatprep.subr.bf16.mxu0 0
  %529 = vmatpush1.bf16.msra.mxu0 0
  %530 = vmatprep.mubr.bf16.mxu0 0
  %531 = vmatmul.mubr.bf16.gmra.mrb[0].mxu0 %v189
  %v532 = vpop.f32.mrb[0].mxu0
  %v533 = vadd.f32 %v160, %v532
  %v534 = vpop.f32.mrb[0].mxu0
  %v535 = vadd.f32 %v160, %v534
  %v536 = vpop.f32.mrb[0].mxu0
  %v537 = vadd.f32 %v165, %v536
  %v538 = vpop.f32.mrb[0].mxu0
  %v539 = vadd.f32 %v165, %v538
  %540 = vmatprep.mubr.bf16.mxu0 0
  %541 = vmatmul.mubr.bf16.gmra.mrb[0].mxu0 %v192
  %v542 = vpop.f32.mrb[0].mxu0
  %v543 = vadd.f32 %v170, %v542
  %v544 = vpop.f32.mrb[0].mxu0
  %v545 = vadd.f32 %v170, %v544
  %v546 = vpop.f32.mrb[0].mxu0
  %v547 = vadd.f32 %v175, %v546
  %v548 = vpop.f32.mrb[0].mxu0
  %v549 = vadd.f32 %v175, %v548
  %550 = vdwg.mxu0
  %v551 = vtanh.pop %v533
  %v552 = vtanh.pop %v535
  %v553 = vtanh.pop %v537
  %v554 = vtanh.pop %v539
  %v555 = vtanh.pop %v543
  %v556 = vtanh.pop %v545
  %v557 = vtanh.pop %v547
  %v558 = vtanh.pop %v549
  %v559 = vmul.f32 %v486, 0.518204
  %v560 = vmul.f32 %v487, 0.518204
  %v561 = vmul.f32 %v488, 0.518204
  %v562 = vmul.f32 %v489, 0.518204
  %v563 = vmul.f32 %v490, 0.518204
  %v564 = vmul.f32 %v491, 0.518204
  %v565 = vmul.f32 %v492, 0.518204
  %v566 = vmul.f32 %v493, 0.518204
  %v567 = vmul.f32 %v551, 0.24422091
  %v568 = vmul.f32 %v552, 0.24422091
  %v569 = vmul.f32 %v553, 0.24422091
  %v570 = vmul.f32 %v554, 0.24422091
  %v571 = vmul.f32 %v555, 0.24422091
  %v572 = vmul.f32 %v556, 0.24422091
  %v573 = vmul.f32 %v557, 0.24422091
  %v574 = vmul.f32 %v558, 0.24422091
  %v575 = vadd.f32 %v559, %v567
  %v576 = vadd.f32 %v560, %v568
  %v577 = vadd.f32 %v561, %v569
  %v578 = vadd.f32 %v562, %v570
  %v579 = vadd.f32 %v563, %v571
  %v580 = vadd.f32 %v564, %v572
  %v581 = vadd.f32 %v565, %v573
  %v582 = vadd.f32 %v566, %v574
  %v583 = vpack.c.bf16 %v577, %v575
  %v584 = vpack.c.bf16 %v578, %v576
  %v585 = vpack.c.bf16 %v581, %v579
  %v586 = vpack.c.bf16 %v582, %v580
  %587 = vmatprep.subr.bf16.mxu0 %v584
  %588 = vmatpush1.bf16.msra.mxu0 %v583
  %589 = vmatprep.subr.bf16.mxu0 %v586
  %590 = vmatpush1.bf16.msra.mxu0 %v585
  %591 = vmatprep.subr.bf16.mxu0 0
  %592 = vmatpush1.bf16.msra.mxu0 0
  %593 = vmatprep.subr.bf16.mxu0 0
  %594 = vmatpush1.bf16.msra.mxu0 0
  %595 = vmatprep.subr.bf16.mxu0 0
  %596 = vmatpush1.bf16.msra.mxu0 0
  %597 = vmatprep.subr.bf16.mxu0 0
  %598 = vmatpush1.bf16.msra.mxu0 0
  %599 = vmatprep.subr.bf16.mxu0 0
  %600 = vmatpush1.bf16.msra.mxu0 0
  %601 = vmatprep.subr.bf16.mxu0 0
  %602 = vmatpush1.bf16.msra.mxu0 0
  %603 = vmatprep.subr.bf16.mxu0 0
  %604 = vmatpush1.bf16.msra.mxu0 0
  %605 = vmatprep.subr.bf16.mxu0 0
  %606 = vmatpush1.bf16.msra.mxu0 0
  %607 = vmatprep.subr.bf16.mxu0 0
  %608 = vmatpush1.bf16.msra.mxu0 0
  %609 = vmatprep.subr.bf16.mxu0 0
  %610 = vmatpush1.bf16.msra.mxu0 0
  %611 = vmatprep.subr.bf16.mxu0 0
  %612 = vmatpush1.bf16.msra.mxu0 0
  %613 = vmatprep.subr.bf16.mxu0 0
  %614 = vmatpush1.bf16.msra.mxu0 0
  %615 = vmatprep.subr.bf16.mxu0 0
  %616 = vmatpush1.bf16.msra.mxu0 0
  %617 = vmatprep.subr.bf16.mxu0 0
  %618 = vmatpush1.bf16.msra.mxu0 0
  %619 = vmatprep.mubr.bf16.mxu0 0
  %620 = vmatmul.mubr.bf16.gmra.mrb[0].mxu0 %v314
  %v621 = vpop.f32.mrb[0].mxu0
  %v622 = vadd.f32 %v286, %v621
  %v623 = vpop.f32.mrb[0].mxu0
  %v624 = vadd.f32 %v286, %v623
  %v625 = vpop.f32.mrb[0].mxu0
  %v626 = vadd.f32 %v291, %v625
  %v627 = vpop.f32.mrb[0].mxu0
  %v628 = vadd.f32 %v291, %v627
  %629 = vmatprep.mubr.bf16.mxu0 0
  %630 = vmatmul.mubr.bf16.gmra.mrb[0].mxu0 %v317
  %v631 = vpop.f32.mrb[0].mxu0
  %v632 = vadd.f32 %v296, %v631
  %v633 = vpop.f32.mrb[0].mxu0
  %v634 = vadd.f32 %v296, %v633
  %v635 = vpop.f32.mrb[0].mxu0
  %v636 = vadd.f32 %v301, %v635
  %v637 = vpop.f32.mrb[0].mxu0
  %v638 = vadd.f32 %v301, %v637
  %639 = vdwg.mxu0
  %v640 = vtanh.pop %v622
  %v641 = vtanh.pop %v624
  %v642 = vtanh.pop %v626
  %v643 = vtanh.pop %v628
  %v644 = vtanh.pop %v632
  %v645 = vtanh.pop %v634
  %v646 = vtanh.pop %v636
  %v647 = vtanh.pop %v638
  %v648 = vmul.f32 %v486, 0.08330519
  %v649 = vmul.f32 %v487, 0.08330519
  %v650 = vmul.f32 %v488, 0.08330519
  %v651 = vmul.f32 %v489, 0.08330519
  %v652 = vmul.f32 %v490, 0.08330519
  %v653 = vmul.f32 %v491, 0.08330519
  %v654 = vmul.f32 %v492, 0.08330519
  %v655 = vmul.f32 %v493, 0.08330519
  %v656 = vmul.f32 %v551, -0.43202302
  %v657 = vmul.f32 %v552, -0.43202302
  %v658 = vmul.f32 %v553, -0.43202302
  %v659 = vmul.f32 %v554, -0.43202302
  %v660 = vmul.f32 %v555, -0.43202302
  %v661 = vmul.f32 %v556, -0.43202302
  %v662 = vmul.f32 %v557, -0.43202302
  %v663 = vmul.f32 %v558, -0.43202302
  %v664 = vadd.f32 %v648, %v656
  %v665 = vadd.f32 %v649, %v657
  %v666 = vadd.f32 %v650, %v658
  %v667 = vadd.f32 %v651, %v659
  %v668 = vadd.f32 %v652, %v660
  %v669 = vadd.f32 %v653, %v661
  %v670 = vadd.f32 %v654, %v662
  %v671 = vadd.f32 %v655, %v663
  %v672 = vmul.f32 %v640, 0.93145025
  %v673 = vmul.f32 %v641, 0.93145025
  %v674 = vmul.f32 %v642, 0.93145025
  %v675 = vmul.f32 %v643, 0.93145025
  %v676 = vmul.f32 %v644, 0.93145025
  %v677 = vmul.f32 %v645, 0.93145025
  %v678 = vmul.f32 %v646, 0.93145025
  %v679 = vmul.f32 %v647, 0.93145025
  %v680 = vadd.f32 %v664, %v672
  %v681 = vadd.f32 %v665, %v673
  %v682 = vadd.f32 %v666, %v674
  %v683 = vadd.f32 %v667, %v675
  %v684 = vadd.f32 %v668, %v676
  %v685 = vadd.f32 %v669, %v677
  %v686 = vadd.f32 %v670, %v678
  %v687 = vadd.f32 %v671, %v679
  %s688 = scalar_lea.vmem [#allocation2], 128
  %v689 = vld [vmem:[%s688] sm:$0xff]
  %v690 = vld [vmem:[%s688 + $0x8] sm:$0xff]
  %v691 = vld [vmem:[%s688 + $0x10] sm:$0xff]
  %v692 = vld [vmem:[%s688 + $0x18] sm:$0xff]
  %v693 = vld [vmem:[%s688 + $0x20] sm:$0xff]
  %v694 = vld [vmem:[%s688 + $0x28] sm:$0xff]
  %v695 = vld [vmem:[%s688 + $0x30] sm:$0xff]
  %v696 = vld [vmem:[%s688 + $0x38] sm:$0xff]
  %v697 = vmul.f32 %v689, 0.2931494
  %v698 = vmul.f32 %v690, 0.2931494
  %v699 = vmul.f32 %v691, 0.2931494
  %v700 = vmul.f32 %v692, 0.2931494
  %v701 = vmul.f32 %v693, 0.2931494
  %v702 = vmul.f32 %v694, 0.2931494
  %v703 = vmul.f32 %v695, 0.2931494
  %v704 = vmul.f32 %v696, 0.2931494
  %v705 = vadd.f32 %v680, %v697
  %v706 = vadd.f32 %v681, %v698
  %v707 = vadd.f32 %v682, %v699
  %v708 = vadd.f32 %v683, %v700
  %v709 = vadd.f32 %v684, %v701
  %v710 = vadd.f32 %v685, %v702
  %v711 = vadd.f32 %v686, %v703
  %v712 = vadd.f32 %v687, %v704
  %s713 = sshll.u32 %s71, 4
  %714 = dma.done %s76, %s713
  %s715 = scalar_lea.hbm %s5, 8192
  // Predicated region
  $region30: #{diffusion_inpaint.1} parent=0 // pred_check
    _
  $region31: #{diffusion_inpaint.1} parent=0 // pred_check_branch
    %717 = sbr.rel target = $region33
  $region32: #{diffusion_inpaint.1} parent=0 // pred_region
    %718 = sst [smem:[#allocation6]] [#allocation11]
    %719 = sst [smem:[#allocation7]] [#allocation10]
  $region33: #{diffusion_inpaint.1} parent=0 // pred_fallthru
    _
  %721 = shalt.err (0)
  %s723 = sshll.u32 [#allocation2], 4
  %s724 = int_to_ptr.vmem [resolvable:$true] %s723
  %726 = dma.hbm_to_vmem [thread:$0]  %s715, 4096, %s724, [#allocation3]
  %s727 = scalar_lea.vmem %s0, 32
  %v728 = vld [vmem:[%s727] sm:$0xf]
  %v729 = vld [vmem:[%s727 + $0x4] sm:$0xf]
  %v730 = vld [vmem:[%s727 + $0x8] sm:$0xf]
  %v731 = vld [vmem:[%s727 + $0xc] sm:$0xf]
  %s732 = scalar_lea.vmem %s0, 48
  %v733 = vld [vmem:[%s732] sm:$0xf]
  %v734 = vld [vmem:[%s732 + $0x4] sm:$0xf]
  %v735 = vld [vmem:[%s732 + $0x8] sm:$0xf]
  %v736 = vld [vmem:[%s732 + $0xc] sm:$0xf]
  %v737 = vmul.f32 %v49, -0.3055572
  %v738 = vmul.f32 %v50, -0.3055572
  %v739 = vmul.f32 %v51, -0.3055572
  %v740 = vmul.f32 %v52, -0.3055572
  %v741 = vmul.f32 %v49, -0.4783718
  %v742 = vmul.f32 %v50, -0.4783718
  %v743 = vmul.f32 %v51, -0.4783718
  %v744 = vmul.f32 %v52, -0.4783718
  %v745 = vld [vmem:[%s75] sm:$0xff]
  %v746 = vld [vmem:[%s75 + $0x8] sm:$0xff]
  %v747 = vld [vmem:[%s75 + $0x10] sm:$0xff]
  %v748 = vld [vmem:[%s75 + $0x18] sm:$0xff]
  %v749 = vld [vmem:[%s75 + $0x20] sm:$0xff]
  %v750 = vld [vmem:[%s75 + $0x28] sm:$0xff]
  %v751 = vld [vmem:[%s75 + $0x30] sm:$0xff]
  %v752 = vld [vmem:[%s75 + $0x38] sm:$0xff]
  %v753 = vmul.f32 %v745, 0.29457292
  %v754 = vmul.f32 %v746, 0.29457292
  %v755 = vmul.f32 %v747, 0.29457292
  %v756 = vmul.f32 %v748, 0.29457292
  %v757 = vmul.f32 %v749, 0.29457292
  %v758 = vmul.f32 %v750, 0.29457292
  %v759 = vmul.f32 %v751, 0.29457292
  %v760 = vmul.f32 %v752, 0.29457292
  %v761 = vadd.f32 %v33, %v753
  %v762 = vadd.f32 %v34, %v754
  %v763 = vadd.f32 %v35, %v755
  %v764 = vadd.f32 %v36, %v756
  %v765 = vadd.f32 %v37, %v757
  %v766 = vadd.f32 %v38, %v758
  %v767 = vadd.f32 %v39, %v759
  %v768 = vadd.f32 %v40, %v760
  %v769 = vsub.f32 %v761, %v705
  %v770 = vsub.f32 %v762, %v706
  %v771 = vsub.f32 %v763, %v707
  %v772 = vsub.f32 %v764, %v708
  %v773 = vsub.f32 %v765, %v709
  %v774 = vsub.f32 %v766, %v710
  %v775 = vsub.f32 %v767, %v711
  %v776 = vsub.f32 %v768, %v712
  %v777 = vmul.f32 %v769, %v41
  %v778 = vmul.f32 %v770, %v42
  %v779 = vmul.f32 %v771, %v43
  %v780 = vmul.f32 %v772, %v44
  %v781 = vmul.f32 %v773, %v45
  %v782 = vmul.f32 %v774, %v46
  %v783 = vmul.f32 %v775, %v47
  %v784 = vmul.f32 %v776, %v48
  %v785 = vadd.f32 %v705, %v777
  %v786 = vadd.f32 %v706, %v778
  %v787 = vadd.f32 %v707, %v779
  %v788 = vadd.f32 %v708, %v780
  %v789 = vadd.f32 %v709, %v781
  %v790 = vadd.f32 %v710, %v782
  %v791 = vadd.f32 %v711, %v783
  %v792 = vadd.f32 %v712, %v784
  %v793 = vpack.c.bf16 %v787, %v785
  %v794 = vpack.c.bf16 %v788, %v786
  %v795 = vpack.c.bf16 %v791, %v789
  %v796 = vpack.c.bf16 %v792, %v790
  %798 = vset.pattern.permute.xlu0 0
  %799 = vperm.xlu0 %798, %v737
  %v800 = vpop.permute.xlu0 %799
  %803 = vset.pattern.permute.xlu0 0
  %804 = vperm.xlu0 %803, %v738
  %v805 = vpop.permute.xlu0 %804
  %808 = vset.pattern.permute.xlu0 0
  %809 = vperm.xlu0 %808, %v739
  %v810 = vpop.permute.xlu0 %809
  %813 = vset.pattern.permute.xlu0 0
  %814 = vperm.xlu0 %813, %v740
  %v815 = vpop.permute.xlu0 %814
  %v821 = vunpack.c.l.b16 %v728
  %v822 = vunpack.c.l.b16 %v729
  %v823 = vunpack.c.l.b16 %v730
  %v824 = vunpack.c.l.b16 %v731
  %v825 = vpack.c.b16 %v822, %v821
  %v826 = vpack.c.b16 %v824, %v823
  %v828 = vsel %vm187, %v825, 0
  %v831 = vsel %vm187, %v826, 0
  %833 = vmatprep.subr.bf16.mxu0 %v794
  %834 = vmatpush1.bf16.msra.mxu0 %v793
  %835 = vmatprep.subr.bf16.mxu0 %v796
  %836 = vmatpush1.bf16.msra.mxu0 %v795
  %837 = vmatprep.subr.bf16.mxu0 0
  %838 = vmatpush1.bf16.msra.mxu0 0
  %839 = vmatprep.subr.bf16.mxu0 0
  %840 = vmatpush1.bf16.msra.mxu0 0
  %841 = vmatprep.subr.bf16.mxu0 0
  %842 = vmatpush1.bf16.msra.mxu0 0
  %843 = vmatprep.subr.bf16.mxu0 0
  %844 = vmatpush1.bf16.msra.mxu0 0
  %845 = vmatprep.subr.bf16.mxu0 0
  %846 = vmatpush1.bf16.msra.mxu0 0
  %847 = vmatprep.subr.bf16.mxu0 0
  %848 = vmatpush1.bf16.msra.mxu0 0
  %849 = vmatprep.subr.bf16.mxu0 0
  %850 = vmatpush1.bf16.msra.mxu0 0
  %851 = vmatprep.subr.bf16.mxu0 0
  %852 = vmatpush1.bf16.msra.mxu0 0
  %853 = vmatprep.subr.bf16.mxu0 0
  %854 = vmatpush1.bf16.msra.mxu0 0
  %855 = vmatprep.subr.bf16.mxu0 0
  %856 = vmatpush1.bf16.msra.mxu0 0
  %857 = vmatprep.subr.bf16.mxu0 0
  %858 = vmatpush1.bf16.msra.mxu0 0
  %859 = vmatprep.subr.bf16.mxu0 0
  %860 = vmatpush1.bf16.msra.mxu0 0
  %861 = vmatprep.subr.bf16.mxu0 0
  %862 = vmatpush1.bf16.msra.mxu0 0
  %863 = vmatprep.subr.bf16.mxu0 0
  %864 = vmatpush1.bf16.msra.mxu0 0
  %865 = vmatprep.mubr.bf16.mxu0 0
  %866 = vmatmul.mubr.bf16.gmra.mrb[0].mxu0 %v828
  %v867 = vpop.f32.mrb[0].mxu0
  %v868 = vadd.f32 %v800, %v867
  %v869 = vpop.f32.mrb[0].mxu0
  %v870 = vadd.f32 %v800, %v869
  %v871 = vpop.f32.mrb[0].mxu0
  %v872 = vadd.f32 %v805, %v871
  %v873 = vpop.f32.mrb[0].mxu0
  %v874 = vadd.f32 %v805, %v873
  %875 = vmatprep.mubr.bf16.mxu0 0
  %876 = vmatmul.mubr.bf16.gmra.mrb[0].mxu0 %v831
  %v877 = vpop.f32.mrb[0].mxu0
  %v878 = vadd.f32 %v810, %v877
  %v879 = vpop.f32.mrb[0].mxu0
  %v880 = vadd.f32 %v810, %v879
  %v881 = vpop.f32.mrb[0].mxu0
  %v882 = vadd.f32 %v815, %v881
  %v883 = vpop.f32.mrb[0].mxu0
  %v884 = vadd.f32 %v815, %v883
  %885 = vdwg.mxu0
  %v886 = vtanh.pop %v868
  %v887 = vtanh.pop %v870
  %v888 = vtanh.pop %v872
  %v889 = vtanh.pop %v874
  %v890 = vtanh.pop %v878
  %v891 = vtanh.pop %v880
  %v892 = vtanh.pop %v882
  %v893 = vtanh.pop %v884
  %v894 = vmul.f32 %v785, 0.87141323
  %v895 = vmul.f32 %v786, 0.87141323
  %v896 = vmul.f32 %v787, 0.87141323
  %v897 = vmul.f32 %v788, 0.87141323
  %v898 = vmul.f32 %v789, 0.87141323
  %v899 = vmul.f32 %v790, 0.87141323
  %v900 = vmul.f32 %v791, 0.87141323
  %v901 = vmul.f32 %v792, 0.87141323
  %v902 = vmul.f32 %v886, 0.12666081
  %v903 = vmul.f32 %v887, 0.12666081
  %v904 = vmul.f32 %v888, 0.12666081
  %v905 = vmul.f32 %v889, 0.12666081
  %v906 = vmul.f32 %v890, 0.12666081
  %v907 = vmul.f32 %v891, 0.12666081
  %v908 = vmul.f32 %v892, 0.12666081
  %v909 = vmul.f32 %v893, 0.12666081
  %v910 = vadd.f32 %v894, %v902
  %v911 = vadd.f32 %v895, %v903
  %v912 = vadd.f32 %v896, %v904
  %v913 = vadd.f32 %v897, %v905
  %v914 = vadd.f32 %v898, %v906
  %v915 = vadd.f32 %v899, %v907
  %v916 = vadd.f32 %v900, %v908
  %v917 = vadd.f32 %v901, %v909
  %v918 = vpack.c.bf16 %v912, %v910
  %v919 = vpack.c.bf16 %v913, %v911
  %v920 = vpack.c.bf16 %v916, %v914
  %v921 = vpack.c.bf16 %v917, %v915
  %923 = vset.pattern.permute.xlu0 0
  %924 = vperm.xlu0 %923, %v741
  %v925 = vpop.permute.xlu0 %924
  %928 = vset.pattern.permute.xlu0 0
  %929 = vperm.xlu0 %928, %v742
  %v930 = vpop.permute.xlu0 %929
  %933 = vset.pattern.permute.xlu0 0
  %934 = vperm.xlu0 %933, %v743
  %v935 = vpop.permute.xlu0 %934
  %938 = vset.pattern.permute.xlu0 0
  %939 = vperm.xlu0 %938, %v744
  %v940 = vpop.permute.xlu0 %939
  %v946 = vunpack.c.l.b16 %v733
  %v947 = vunpack.c.l.b16 %v734
  %v948 = vunpack.c.l.b16 %v735
  %v949 = vunpack.c.l.b16 %v736
  %v950 = vpack.c.b16 %v947, %v946
  %v951 = vpack.c.b16 %v949, %v948
  %v953 = vsel %vm187, %v950, 0
  %v956 = vsel %vm187, %v951, 0
  %958 = vmatprep.subr.bf16.mxu0 %v919
  %959 = vmatpush1.bf16.msra.mxu0 %v918
  %960 = vmatprep.subr.bf16.mxu0 %v921
  %961 = vmatpush1.bf16.msra.mxu0 %v920
  %962 = vmatprep.subr.bf16.mxu0 0
  %963 = vmatpush1.bf16.msra.mxu0 0
  %964 = vmatprep.subr.bf16.mxu0 0
  %965 = vmatpush1.bf16.msra.mxu0 0
  %966 = vmatprep.subr.bf16.mxu0 0
  %967 = vmatpush1.bf16.msra.mxu0 0
  %968 = vmatprep.subr.bf16.mxu0 0
  %969 = vmatpush1.bf16.msra.mxu0 0
  %970 = vmatprep.subr.bf16.mxu0 0
  %971 = vmatpush1.bf16.msra.mxu0 0
  %972 = vmatprep.subr.bf16.mxu0 0
  %973 = vmatpush1.bf16.msra.mxu0 0
  %974 = vmatprep.subr.bf16.mxu0 0
  %975 = vmatpush1.bf16.msra.mxu0 0
  %976 = vmatprep.subr.bf16.mxu0 0
  %977 = vmatpush1.bf16.msra.mxu0 0
  %978 = vmatprep.subr.bf16.mxu0 0
  %979 = vmatpush1.bf16.msra.mxu0 0
  %980 = vmatprep.subr.bf16.mxu0 0
  %981 = vmatpush1.bf16.msra.mxu0 0
  %982 = vmatprep.subr.bf16.mxu0 0
  %983 = vmatpush1.bf16.msra.mxu0 0
  %984 = vmatprep.subr.bf16.mxu0 0
  %985 = vmatpush1.bf16.msra.mxu0 0
  %986 = vmatprep.subr.bf16.mxu0 0
  %987 = vmatpush1.bf16.msra.mxu0 0
  %988 = vmatprep.subr.bf16.mxu0 0
  %989 = vmatpush1.bf16.msra.mxu0 0
  %990 = vmatprep.mubr.bf16.mxu0 0
  %991 = vmatmul.mubr.bf16.gmra.mrb[0].mxu0 %v953
  %v992 = vpop.f32.mrb[0].mxu0
  %v993 = vadd.f32 %v925, %v992
  %v994 = vpop.f32.mrb[0].mxu0
  %v995 = vadd.f32 %v925, %v994
  %v996 = vpop.f32.mrb[0].mxu0
  %v997 = vadd.f32 %v930, %v996
  %v998 = vpop.f32.mrb[0].mxu0
  %v999 = vadd.f32 %v930, %v998
  %1000 = vmatprep.mubr.bf16.mxu0 0
  %1001 = vmatmul.mubr.bf16.gmra.mrb[0].mxu0 %v956
  %v1002 = vpop.f32.mrb[0].mxu0
  %v1003 = vadd.f32 %v935, %v1002
  %v1004 = vpop.f32.mrb[0].mxu0
  %v1005 = vadd.f32 %v935, %v1004
  %v1006 = vpop.f32.mrb[0].mxu0
  %v1007 = vadd.f32 %v940, %v1006
  %v1008 = vpop.f32.mrb[0].mxu0
  %v1009 = vadd.f32 %v940, %v1008
  %1010 = vdwg.mxu0
  %v1011 = vtanh.pop %v993
  %v1012 = vtanh.pop %v995
  %v1013 = vtanh.pop %v997
  %v1014 = vtanh.pop %v999
  %v1015 = vtanh.pop %v1003
  %v1016 = vtanh.pop %v1005
  %v1017 = vtanh.pop %v1007
  %v1018 = vtanh.pop %v1009
  %v1019 = vmul.f32 %v785, 0.8608869
  %v1020 = vmul.f32 %v786, 0.8608869
  %v1021 = vmul.f32 %v787, 0.8608869
  %v1022 = vmul.f32 %v788, 0.8608869
  %v1023 = vmul.f32 %v789, 0.8608869
  %v1024 = vmul.f32 %v790, 0.8608869
  %v1025 = vmul.f32 %v791, 0.8608869
  %v1026 = vmul.f32 %v792, 0.8608869
  %v1027 = vmul.f32 %v886, -0.020220233
  %v1028 = vmul.f32 %v887, -0.020220233
  %v1029 = vmul.f32 %v888, -0.020220233
  %v1030 = vmul.f32 %v889, -0.020220233
  %v1031 = vmul.f32 %v890, -0.020220233
  %v1032 = vmul.f32 %v891, -0.020220233
  %v1033 = vmul.f32 %v892, -0.020220233
  %v1034 = vmul.f32 %v893, -0.020220233
  %v1035 = vadd.f32 %v1019, %v1027
  %v1036 = vadd.f32 %v1020, %v1028
  %v1037 = vadd.f32 %v1021, %v1029
  %v1038 = vadd.f32 %v1022, %v1030
  %v1039 = vadd.f32 %v1023, %v1031
  %v1040 = vadd.f32 %v1024, %v1032
  %v1041 = vadd.f32 %v1025, %v1033
  %v1042 = vadd.f32 %v1026, %v1034
  %v1043 = vmul.f32 %v1011, 0.28199145
  %v1044 = vmul.f32 %v1012, 0.28199145
  %v1045 = vmul.f32 %v1013, 0.28199145
  %v1046 = vmul.f32 %v1014, 0.28199145
  %v1047 = vmul.f32 %v1015, 0.28199145
  %v1048 = vmul.f32 %v1016, 0.28199145
  %v1049 = vmul.f32 %v1017, 0.28199145
  %v1050 = vmul.f32 %v1018, 0.28199145
  %v1051 = vadd.f32 %v1035, %v1043
  %v1052 = vadd.f32 %v1036, %v1044
  %v1053 = vadd.f32 %v1037, %v1045
  %v1054 = vadd.f32 %v1038, %v1046
  %v1055 = vadd.f32 %v1039, %v1047
  %v1056 = vadd.f32 %v1040, %v1048
  %v1057 = vadd.f32 %v1041, %v1049
  %v1058 = vadd.f32 %v1042, %v1050
  %s1059 = scalar_lea.vmem [#allocation2], 320
  %v1060 = vld [vmem:[%s1059] sm:$0xff]
  %v1061 = vld [vmem:[%s1059 + $0x8] sm:$0xff]
  %v1062 = vld [vmem:[%s1059 + $0x10] sm:$0xff]
  %v1063 = vld [vmem:[%s1059 + $0x18] sm:$0xff]
  %v1064 = vld [vmem:[%s1059 + $0x20] sm:$0xff]
  %v1065 = vld [vmem:[%s1059 + $0x28] sm:$0xff]
  %v1066 = vld [vmem:[%s1059 + $0x30] sm:$0xff]
  %v1067 = vld [vmem:[%s1059 + $0x38] sm:$0xff]
  %v1068 = vmul.f32 %v1060, 0.012795906
  %v1069 = vmul.f32 %v1061, 0.012795906
  %v1070 = vmul.f32 %v1062, 0.012795906
  %v1071 = vmul.f32 %v1063, 0.012795906
  %v1072 = vmul.f32 %v1064, 0.012795906
  %v1073 = vmul.f32 %v1065, 0.012795906
  %v1074 = vmul.f32 %v1066, 0.012795906
  %v1075 = vmul.f32 %v1067, 0.012795906
  %v1076 = vadd.f32 %v1051, %v1068
  %v1077 = vadd.f32 %v1052, %v1069
  %v1078 = vadd.f32 %v1053, %v1070
  %v1079 = vadd.f32 %v1054, %v1071
  %v1080 = vadd.f32 %v1055, %v1072
  %v1081 = vadd.f32 %v1056, %v1073
  %v1082 = vadd.f32 %v1057, %v1074
  %v1083 = vadd.f32 %v1058, %v1075
  %s1084 = scalar_lea.vmem [#allocation2], 448
  %v1085 = vld [vmem:[%s1084] sm:$0xff]
  %v1086 = vld [vmem:[%s1084 + $0x8] sm:$0xff]
  %v1087 = vld [vmem:[%s1084 + $0x10] sm:$0xff]
  %v1088 = vld [vmem:[%s1084 + $0x18] sm:$0xff]
  %v1089 = vld [vmem:[%s1084 + $0x20] sm:$0xff]
  %v1090 = vld [vmem:[%s1084 + $0x28] sm:$0xff]
  %v1091 = vld [vmem:[%s1084 + $0x30] sm:$0xff]
  %v1092 = vld [vmem:[%s1084 + $0x38] sm:$0xff]
  %v1093 = vmul.f32 %v1085, 0.29429433
  %v1094 = vmul.f32 %v1086, 0.29429433
  %v1095 = vmul.f32 %v1087, 0.29429433
  %v1096 = vmul.f32 %v1088, 0.29429433
  %v1097 = vmul.f32 %v1089, 0.29429433
  %v1098 = vmul.f32 %v1090, 0.29429433
  %v1099 = vmul.f32 %v1091, 0.29429433
  %v1100 = vmul.f32 %v1092, 0.29429433
  %v1101 = vadd.f32 %v1076, %v1093
  %v1102 = vadd.f32 %v1077, %v1094
  %v1103 = vadd.f32 %v1078, %v1095
  %v1104 = vadd.f32 %v1079, %v1096
  %v1105 = vadd.f32 %v1080, %v1097
  %v1106 = vadd.f32 %v1081, %v1098
  %v1107 = vadd.f32 %v1082, %v1099
  %v1108 = vadd.f32 %v1083, %v1100
  %v1109 = vsub.f32 %v761, %v1101
  %v1110 = vsub.f32 %v762, %v1102
  %v1111 = vsub.f32 %v763, %v1103
  %v1112 = vsub.f32 %v764, %v1104
  %v1113 = vsub.f32 %v765, %v1105
  %v1114 = vsub.f32 %v766, %v1106
  %v1115 = vsub.f32 %v767, %v1107
  %v1116 = vsub.f32 %v768, %v1108
  %v1117 = vmul.f32 %v1109, %v41
  %v1118 = vmul.f32 %v1110, %v42
  %v1119 = vmul.f32 %v1111, %v43
  %v1120 = vmul.f32 %v1112, %v44
  %v1121 = vmul.f32 %v1113, %v45
  %v1122 = vmul.f32 %v1114, %v46
  %v1123 = vmul.f32 %v1115, %v47
  %v1124 = vmul.f32 %v1116, %v48
  %v1125 = vadd.f32 %v1101, %v1117
  %v1126 = vadd.f32 %v1102, %v1118
  %v1127 = vadd.f32 %v1103, %v1119
  %v1128 = vadd.f32 %v1104, %v1120
  %v1129 = vadd.f32 %v1105, %v1121
  %v1130 = vadd.f32 %v1106, %v1122
  %v1131 = vadd.f32 %v1107, %v1123
  %v1132 = vadd.f32 %v1108, %v1124
  %v1133 = vpack.c.bf16 %v1127, %v1125
  %v1134 = vpack.c.bf16 %v1128, %v1126
  %v1135 = vpack.c.bf16 %v1131, %v1129
  %v1136 = vpack.c.bf16 %v1132, %v1130
  %1137 = vmatprep.subr.bf16.mxu0 %v1134
  %1138 = vmatpush1.bf16.msra.mxu0 %v1133
  %1139 = vmatprep.subr.bf16.mxu0 %v1136
  %1140 = vmatpush1.bf16.msra.mxu0 %v1135
  %1141 = vmatprep.subr.bf16.mxu0 0
  %1142 = vmatpush1.bf16.msra.mxu0 0
  %1143 = vmatprep.subr.bf16.mxu0 0
  %1144 = vmatpush1.bf16.msra.mxu0 0
  %1145 = vmatprep.subr.bf16.mxu0 0
  %1146 = vmatpush1.bf16.msra.mxu0 0
  %1147 = vmatprep.subr.bf16.mxu0 0
  %1148 = vmatpush1.bf16.msra.mxu0 0
  %1149 = vmatprep.subr.bf16.mxu0 0
  %1150 = vmatpush1.bf16.msra.mxu0 0
  %1151 = vmatprep.subr.bf16.mxu0 0
  %1152 = vmatpush1.bf16.msra.mxu0 0
  %1153 = vmatprep.subr.bf16.mxu0 0
  %1154 = vmatpush1.bf16.msra.mxu0 0
  %1155 = vmatprep.subr.bf16.mxu0 0
  %1156 = vmatpush1.bf16.msra.mxu0 0
  %1157 = vmatprep.subr.bf16.mxu0 0
  %1158 = vmatpush1.bf16.msra.mxu0 0
  %1159 = vmatprep.subr.bf16.mxu0 0
  %1160 = vmatpush1.bf16.msra.mxu0 0
  %1161 = vmatprep.subr.bf16.mxu0 0
  %1162 = vmatpush1.bf16.msra.mxu0 0
  %1163 = vmatprep.subr.bf16.mxu0 0
  %1164 = vmatpush1.bf16.msra.mxu0 0
  %1165 = vmatprep.subr.bf16.mxu0 0
  %1166 = vmatpush1.bf16.msra.mxu0 0
  %1167 = vmatprep.subr.bf16.mxu0 0
  %1168 = vmatpush1.bf16.msra.mxu0 0
  %1169 = vmatprep.mubr.bf16.mxu0 0
  %1170 = vmatmul.mubr.bf16.gmra.mrb[0].mxu0 %v828
  %v1171 = vpop.f32.mrb[0].mxu0
  %v1172 = vadd.f32 %v800, %v1171
  %v1173 = vpop.f32.mrb[0].mxu0
  %v1174 = vadd.f32 %v800, %v1173
  %v1175 = vpop.f32.mrb[0].mxu0
  %v1176 = vadd.f32 %v805, %v1175
  %v1177 = vpop.f32.mrb[0].mxu0
  %v1178 = vadd.f32 %v805, %v1177
  %1179 = vmatprep.mubr.bf16.mxu0 0
  %1180 = vmatmul.mubr.bf16.gmra.mrb[0].mxu0 %v831
  %v1181 = vpop.f32.mrb[0].mxu0
  %v1182 = vadd.f32 %v810, %v1181
  %v1183 = vpop.f32.mrb[0].mxu0
  %v1184 = vadd.f32 %v810, %v1183
  %v1185 = vpop.f32.mrb[0].mxu0
  %v1186 = vadd.f32 %v815, %v1185
  %v1187 = vpop.f32.mrb[0].mxu0
  %v1188 = vadd.f32 %v815, %v1187
  %1189 = vdwg.mxu0
  %v1190 = vtanh.pop %v1172
  %v1191 = vtanh.pop %v1174
  %v1192 = vtanh.pop %v1176
  %v1193 = vtanh.pop %v1178
  %v1194 = vtanh.pop %v1182
  %v1195 = vtanh.pop %v1184
  %v1196 = vtanh.pop %v1186
  %v1197 = vtanh.pop %v1188
  %v1198 = vmul.f32 %v1125, 0.87141323
  %v1199 = vmul.f32 %v1126, 0.87141323
  %v1200 = vmul.f32 %v1127, 0.87141323
  %v1201 = vmul.f32 %v1128, 0.87141323
  %v1202 = vmul.f32 %v1129, 0.87141323
  %v1203 = vmul.f32 %v1130, 0.87141323
  %v1204 = vmul.f32 %v1131, 0.87141323
  %v1205 = vmul.f32 %v1132, 0.87141323
  %v1206 = vmul.f32 %v1190, 0.12666081
  %v1207 = vmul.f32 %v1191, 0.12666081
  %v1208 = vmul.f32 %v1192, 0.12666081
  %v1209 = vmul.f32 %v1193, 0.12666081
  %v1210 = vmul.f32 %v1194, 0.12666081
  %v1211 = vmul.f32 %v1195, 0.12666081
  %v1212 = vmul.f32 %v1196, 0.12666081
  %v1213 = vmul.f32 %v1197, 0.12666081
  %v1214 = vadd.f32 %v1198, %v1206
  %v1215 = vadd.f32 %v1199, %v1207
  %v1216 = vadd.f32 %v1200, %v1208
  %v1217 = vadd.f32 %v1201, %v1209
  %v1218 = vadd.f32 %v1202, %v1210
  %v1219 = vadd.f32 %v1203, %v1211
  %v1220 = vadd.f32 %v1204, %v1212
  %v1221 = vadd.f32 %v1205, %v1213
  %v1222 = vpack.c.bf16 %v1216, %v1214
  %v1223 = vpack.c.bf16 %v1217, %v1215
  %v1224 = vpack.c.bf16 %v1220, %v1218
  %v1225 = vpack.c.bf16 %v1221, %v1219
  %1226 = vmatprep.subr.bf16.mxu0 %v1223
  %1227 = vmatpush1.bf16.msra.mxu0 %v1222
  %1228 = vmatprep.subr.bf16.mxu0 %v1225
  %1229 = vmatpush1.bf16.msra.mxu0 %v1224
  %1230 = vmatprep.subr.bf16.mxu0 0
  %1231 = vmatpush1.bf16.msra.mxu0 0
  %1232 = vmatprep.subr.bf16.mxu0 0
  %1233 = vmatpush1.bf16.msra.mxu0 0
  %1234 = vmatprep.subr.bf16.mxu0 0
  %1235 = vmatpush1.bf16.msra.mxu0 0
  %1236 = vmatprep.subr.bf16.mxu0 0
  %1237 = vmatpush1.bf16.msra.mxu0 0
  %1238 = vmatprep.subr.bf16.mxu0 0
  %1239 = vmatpush1.bf16.msra.mxu0 0
  %1240 = vmatprep.subr.bf16.mxu0 0
  %1241 = vmatpush1.bf16.msra.mxu0 0
  %1242 = vmatprep.subr.bf16.mxu0 0
  %1243 = vmatpush1.bf16.msra.mxu0 0
  %1244 = vmatprep.subr.bf16.mxu0 0
  %1245 = vmatpush1.bf16.msra.mxu0 0
  %1246 = vmatprep.subr.bf16.mxu0 0
  %1247 = vmatpush1.bf16.msra.mxu0 0
  %1248 = vmatprep.subr.bf16.mxu0 0
  %1249 = vmatpush1.bf16.msra.mxu0 0
  %1250 = vmatprep.subr.bf16.mxu0 0
  %1251 = vmatpush1.bf16.msra.mxu0 0
  %1252 = vmatprep.subr.bf16.mxu0 0
  %1253 = vmatpush1.bf16.msra.mxu0 0
  %1254 = vmatprep.subr.bf16.mxu0 0
  %1255 = vmatpush1.bf16.msra.mxu0 0
  %1256 = vmatprep.subr.bf16.mxu0 0
  %1257 = vmatpush1.bf16.msra.mxu0 0
  %1258 = vmatprep.mubr.bf16.mxu0 0
  %1259 = vmatmul.mubr.bf16.gmra.mrb[0].mxu0 %v953
  %v1260 = vpop.f32.mrb[0].mxu0
  %v1261 = vadd.f32 %v925, %v1260
  %v1262 = vpop.f32.mrb[0].mxu0
  %v1263 = vadd.f32 %v925, %v1262
  %v1264 = vpop.f32.mrb[0].mxu0
  %v1265 = vadd.f32 %v930, %v1264
  %v1266 = vpop.f32.mrb[0].mxu0
  %v1267 = vadd.f32 %v930, %v1266
  %1268 = vmatprep.mubr.bf16.mxu0 0
  %1269 = vmatmul.mubr.bf16.gmra.mrb[0].mxu0 %v956
  %v1270 = vpop.f32.mrb[0].mxu0
  %v1271 = vadd.f32 %v935, %v1270
  %v1272 = vpop.f32.mrb[0].mxu0
  %v1273 = vadd.f32 %v935, %v1272
  %v1274 = vpop.f32.mrb[0].mxu0
  %v1275 = vadd.f32 %v940, %v1274
  %v1276 = vpop.f32.mrb[0].mxu0
  %v1277 = vadd.f32 %v940, %v1276
  %1278 = vdwg.mxu0
  %v1279 = vtanh.pop %v1261
  %v1280 = vtanh.pop %v1263
  %v1281 = vtanh.pop %v1265
  %v1282 = vtanh.pop %v1267
  %v1283 = vtanh.pop %v1271
  %v1284 = vtanh.pop %v1273
  %v1285 = vtanh.pop %v1275
  %v1286 = vtanh.pop %v1277
  %v1287 = vmul.f32 %v1125, 0.8608869
  %v1288 = vmul.f32 %v1126, 0.8608869
  %v1289 = vmul.f32 %v1127, 0.8608869
  %v1290 = vmul.f32 %v1128, 0.8608869
  %v1291 = vmul.f32 %v1129, 0.8608869
  %v1292 = vmul.f32 %v1130, 0.8608869
  %v1293 = vmul.f32 %v1131, 0.8608869
  %v1294 = vmul.f32 %v1132, 0.8608869
  %v1295 = vmul.f32 %v1190, -0.020220233
  %v1296 = vmul.f32 %v1191, -0.020220233
  %v1297 = vmul.f32 %v1192, -0.020220233
  %v1298 = vmul.f32 %v1193, -0.020220233
  %v1299 = vmul.f32 %v1194, -0.020220233
  %v1300 = vmul.f32 %v1195, -0.020220233
  %v1301 = vmul.f32 %v1196, -0.020220233
  %v1302 = vmul.f32 %v1197, -0.020220233
  %v1303 = vadd.f32 %v1287, %v1295
  %v1304 = vadd.f32 %v1288, %v1296
  %v1305 = vadd.f32 %v1289, %v1297
  %v1306 = vadd.f32 %v1290, %v1298
  %v1307 = vadd.f32 %v1291, %v1299
  %v1308 = vadd.f32 %v1292, %v1300
  %v1309 = vadd.f32 %v1293, %v1301
  %v1310 = vadd.f32 %v1294, %v1302
  %v1311 = vmul.f32 %v1279, 0.28199145
  %v1312 = vmul.f32 %v1280, 0.28199145
  %v1313 = vmul.f32 %v1281, 0.28199145
  %v1314 = vmul.f32 %v1282, 0.28199145
  %v1315 = vmul.f32 %v1283, 0.28199145
  %v1316 = vmul.f32 %v1284, 0.28199145
  %v1317 = vmul.f32 %v1285, 0.28199145
  %v1318 = vmul.f32 %v1286, 0.28199145
  %v1319 = vadd.f32 %v1303, %v1311
  %v1320 = vadd.f32 %v1304, %v1312
  %v1321 = vadd.f32 %v1305, %v1313
  %v1322 = vadd.f32 %v1306, %v1314
  %v1323 = vadd.f32 %v1307, %v1315
  %v1324 = vadd.f32 %v1308, %v1316
  %v1325 = vadd.f32 %v1309, %v1317
  %v1326 = vadd.f32 %v1310, %v1318
  %s1327 = scalar_lea.vmem [#allocation2], 384
  %v1328 = vld [vmem:[%s1327] sm:$0xff]
  %v1329 = vld [vmem:[%s1327 + $0x8] sm:$0xff]
  %v1330 = vld [vmem:[%s1327 + $0x10] sm:$0xff]
  %v1331 = vld [vmem:[%s1327 + $0x18] sm:$0xff]
  %v1332 = vld [vmem:[%s1327 + $0x20] sm:$0xff]
  %v1333 = vld [vmem:[%s1327 + $0x28] sm:$0xff]
  %v1334 = vld [vmem:[%s1327 + $0x30] sm:$0xff]
  %v1335 = vld [vmem:[%s1327 + $0x38] sm:$0xff]
  %v1336 = vmul.f32 %v1328, 0.012795906
  %v1337 = vmul.f32 %v1329, 0.012795906
  %v1338 = vmul.f32 %v1330, 0.012795906
  %v1339 = vmul.f32 %v1331, 0.012795906
  %v1340 = vmul.f32 %v1332, 0.012795906
  %v1341 = vmul.f32 %v1333, 0.012795906
  %v1342 = vmul.f32 %v1334, 0.012795906
  %v1343 = vmul.f32 %v1335, 0.012795906
  %v1344 = vadd.f32 %v1319, %v1336
  %v1345 = vadd.f32 %v1320, %v1337
  %v1346 = vadd.f32 %v1321, %v1338
  %v1347 = vadd.f32 %v1322, %v1339
  %v1348 = vadd.f32 %v1323, %v1340
  %v1349 = vadd.f32 %v1324, %v1341
  %v1350 = vadd.f32 %v1325, %v1342
  %v1351 = vadd.f32 %v1326, %v1343
  %s1352 = sshll.u32 %s71, 4
  %1353 = dma.done [#allocation3], %s1352
  %s1354 = scalar_lea.vmem %s0, 64
  %v1355 = vld [vmem:[%s1354] sm:$0xf]
  %v1356 = vld [vmem:[%s1354 + $0x4] sm:$0xf]
  %v1357 = vld [vmem:[%s1354 + $0x8] sm:$0xf]
  %v1358 = vld [vmem:[%s1354 + $0xc] sm:$0xf]
  %s1359 = scalar_lea.vmem %s0, 80
  %v1360 = vld [vmem:[%s1359] sm:$0xf]
  %v1361 = vld [vmem:[%s1359 + $0x4] sm:$0xf]
  %v1362 = vld [vmem:[%s1359 + $0x8] sm:$0xf]
  %v1363 = vld [vmem:[%s1359 + $0xc] sm:$0xf]
  %v1364 = vmul.f32 %v49, -1.089421
  %v1365 = vmul.f32 %v50, -1.089421
  %v1366 = vmul.f32 %v51, -1.089421
  %v1367 = vmul.f32 %v52, -1.089421
  %v1368 = vmul.f32 %v49, -1.2626926
  %v1369 = vmul.f32 %v50, -1.2626926
  %v1370 = vmul.f32 %v51, -1.2626926
  %v1371 = vmul.f32 %v52, -1.2626926
  %v1372 = vld [vmem:[#allocation2] sm:$0xff]
  %v1373 = vld [vmem:[#allocation2 + $0x8] sm:$0xff]
  %v1374 = vld [vmem:[#allocation2 + $0x10] sm:$0xff]
  %v1375 = vld [vmem:[#allocation2 + $0x18] sm:$0xff]
  %v1376 = vld [vmem:[#allocation2 + $0x20] sm:$0xff]
  %v1377 = vld [vmem:[#allocation2 + $0x28] sm:$0xff]
  %v1378 = vld [vmem:[#allocation2 + $0x30] sm:$0xff]
  %v1379 = vld [vmem:[#allocation2 + $0x38] sm:$0xff]
  %v1380 = vmul.f32 %v1372, 0.012808017
  %v1381 = vmul.f32 %v1373, 0.012808017
  %v1382 = vmul.f32 %v1374, 0.012808017
  %v1383 = vmul.f32 %v1375, 0.012808017
  %v1384 = vmul.f32 %v1376, 0.012808017
  %v1385 = vmul.f32 %v1377, 0.012808017
  %v1386 = vmul.f32 %v1378, 0.012808017
  %v1387 = vmul.f32 %v1379, 0.012808017
  %v1388 = vadd.f32 %v33, %v1380
  %v1389 = vadd.f32 %v34, %v1381
  %v1390 = vadd.f32 %v35, %v1382
  %v1391 = vadd.f32 %v36, %v1383
  %v1392 = vadd.f32 %v37, %v1384
  %v1393 = vadd.f32 %v38, %v1385
  %v1394 = vadd.f32 %v39, %v1386
  %v1395 = vadd.f32 %v40, %v1387
  %v1396 = vsub.f32 %v1388, %v1344
  %v1397 = vsub.f32 %v1389, %v1345
  %v1398 = vsub.f32 %v1390, %v1346
  %v1399 = vsub.f32 %v1391, %v1347
  %v1400 = vsub.f32 %v1392, %v1348
  %v1401 = vsub.f32 %v1393, %v1349
  %v1402 = vsub.f32 %v1394, %v1350
  %v1403 = vsub.f32 %v1395, %v1351
  %v1404 = vmul.f32 %v1396, %v41
  %v1405 = vmul.f32 %v1397, %v42
  %v1406 = vmul.f32 %v1398, %v43
  %v1407 = vmul.f32 %v1399, %v44
  %v1408 = vmul.f32 %v1400, %v45
  %v1409 = vmul.f32 %v1401, %v46
  %v1410 = vmul.f32 %v1402, %v47
  %v1411 = vmul.f32 %v1403, %v48
  %v1412 = vadd.f32 %v1344, %v1404
  %v1413 = vadd.f32 %v1345, %v1405
  %v1414 = vadd.f32 %v1346, %v1406
  %v1415 = vadd.f32 %v1347, %v1407
  %v1416 = vadd.f32 %v1348, %v1408
  %v1417 = vadd.f32 %v1349, %v1409
  %v1418 = vadd.f32 %v1350, %v1410
  %v1419 = vadd.f32 %v1351, %v1411
  %v1420 = vpack.c.bf16 %v1414, %v1412
  %v1421 = vpack.c.bf16 %v1415, %v1413
  %v1422 = vpack.c.bf16 %v1418, %v1416
  %v1423 = vpack.c.bf16 %v1419, %v1417
  %1425 = vset.pattern.permute.xlu0 0
  %1426 = vperm.xlu0 %1425, %v1364
  %v1427 = vpop.permute.xlu0 %1426
  %1430 = vset.pattern.permute.xlu0 0
  %1431 = vperm.xlu0 %1430, %v1365
  %v1432 = vpop.permute.xlu0 %1431
  %1435 = vset.pattern.permute.xlu0 0
  %1436 = vperm.xlu0 %1435, %v1366
  %v1437 = vpop.permute.xlu0 %1436
  %1440 = vset.pattern.permute.xlu0 0
  %1441 = vperm.xlu0 %1440, %v1367
  %v1442 = vpop.permute.xlu0 %1441
  %v1448 = vunpack.c.l.b16 %v1355
  %v1449 = vunpack.c.l.b16 %v1356
  %v1450 = vunpack.c.l.b16 %v1357
  %v1451 = vunpack.c.l.b16 %v1358
  %v1452 = vpack.c.b16 %v1449, %v1448
  %v1453 = vpack.c.b16 %v1451, %v1450
  %v1455 = vsel %vm187, %v1452, 0
  %v1458 = vsel %vm187, %v1453, 0
  %1460 = vmatprep.subr.bf16.mxu0 %v1421
  %1461 = vmatpush1.bf16.msra.mxu0 %v1420
  %1462 = vmatprep.subr.bf16.mxu0 %v1423
  %1463 = vmatpush1.bf16.msra.mxu0 %v1422
  %1464 = vmatprep.subr.bf16.mxu0 0
  %1465 = vmatpush1.bf16.msra.mxu0 0
  %1466 = vmatprep.subr.bf16.mxu0 0
  %1467 = vmatpush1.bf16.msra.mxu0 0
  %1468 = vmatprep.subr.bf16.mxu0 0
  %1469 = vmatpush1.bf16.msra.mxu0 0
  %1470 = vmatprep.subr.bf16.mxu0 0
  %1471 = vmatpush1.bf16.msra.mxu0 0
  %1472 = vmatprep.subr.bf16.mxu0 0
  %1473 = vmatpush1.bf16.msra.mxu0 0
  %1474 = vmatprep.subr.bf16.mxu0 0
  %1475 = vmatpush1.bf16.msra.mxu0 0
  %1476 = vmatprep.subr.bf16.mxu0 0
  %1477 = vmatpush1.bf16.msra.mxu0 0
  %1478 = vmatprep.subr.bf16.mxu0 0
  %1479 = vmatpush1.bf16.msra.mxu0 0
  %1480 = vmatprep.subr.bf16.mxu0 0
  %1481 = vmatpush1.bf16.msra.mxu0 0
  %1482 = vmatprep.subr.bf16.mxu0 0
  %1483 = vmatpush1.bf16.msra.mxu0 0
  %1484 = vmatprep.subr.bf16.mxu0 0
  %1485 = vmatpush1.bf16.msra.mxu0 0
  %1486 = vmatprep.subr.bf16.mxu0 0
  %1487 = vmatpush1.bf16.msra.mxu0 0
  %1488 = vmatprep.subr.bf16.mxu0 0
  %1489 = vmatpush1.bf16.msra.mxu0 0
  %1490 = vmatprep.subr.bf16.mxu0 0
  %1491 = vmatpush1.bf16.msra.mxu0 0
  %1492 = vmatprep.mubr.bf16.mxu0 0
  %1493 = vmatmul.mubr.bf16.gmra.mrb[0].mxu0 %v1455
  %v1494 = vpop.f32.mrb[0].mxu0
  %v1495 = vadd.f32 %v1427, %v1494
  %v1496 = vpop.f32.mrb[0].mxu0
  %v1497 = vadd.f32 %v1427, %v1496
  %v1498 = vpop.f32.mrb[0].mxu0
  %v1499 = vadd.f32 %v1432, %v1498
  %v1500 = vpop.f32.mrb[0].mxu0
  %v1501 = vadd.f32 %v1432, %v1500
  %1502 = vmatprep.mubr.bf16.mxu0 0
  %1503 = vmatmul.mubr.bf16.gmra.mrb[0].mxu0 %v1458
  %v1504 = vpop.f32.mrb[0].mxu0
  %v1505 = vadd.f32 %v1437, %v1504
  %v1506 = vpop.f32.mrb[0].mxu0
  %v1507 = vadd.f32 %v1437, %v1506
  %v1508 = vpop.f32.mrb[0].mxu0
  %v1509 = vadd.f32 %v1442, %v1508
  %v1510 = vpop.f32.mrb[0].mxu0
  %v1511 = vadd.f32 %v1442, %v1510
  %1512 = vdwg.mxu0
  %v1513 = vtanh.pop %v1495
  %v1514 = vtanh.pop %v1497
  %v1515 = vtanh.pop %v1499
  %v1516 = vtanh.pop %v1501
  %v1517 = vtanh.pop %v1505
  %v1518 = vtanh.pop %v1507
  %v1519 = vtanh.pop %v1509
  %v1520 = vtanh.pop %v1511
  %v1521 = vmul.f32 %v1412, 0.9996721
  %v1522 = vmul.f32 %v1413, 0.9996721
  %v1523 = vmul.f32 %v1414, 0.9996721
  %v1524 = vmul.f32 %v1415, 0.9996721
  %v1525 = vmul.f32 %v1416, 0.9996721
  %v1526 = vmul.f32 %v1417, 0.9996721
  %v1527 = vmul.f32 %v1418, 0.9996721
  %v1528 = vmul.f32 %v1419, 0.9996721
  %v1529 = vmul.f32 %v1513, 0.0064015184
  %v1530 = vmul.f32 %v1514, 0.0064015184
  %v1531 = vmul.f32 %v1515, 0.0064015184
  %v1532 = vmul.f32 %v1516, 0.0064015184
  %v1533 = vmul.f32 %v1517, 0.0064015184
  %v1534 = vmul.f32 %v1518, 0.0064015184
  %v1535 = vmul.f32 %v1519, 0.0064015184
  %v1536 = vmul.f32 %v1520, 0.0064015184
  %v1537 = vadd.f32 %v1521, %v1529
  %v1538 = vadd.f32 %v1522, %v1530
  %v1539 = vadd.f32 %v1523, %v1531
  %v1540 = vadd.f32 %v1524, %v1532
  %v1541 = vadd.f32 %v1525, %v1533
  %v1542 = vadd.f32 %v1526, %v1534
  %v1543 = vadd.f32 %v1527, %v1535
  %v1544 = vadd.f32 %v1528, %v1536
  %v1545 = vpack.c.bf16 %v1539, %v1537
  %v1546 = vpack.c.bf16 %v1540, %v1538
  %v1547 = vpack.c.bf16 %v1543, %v1541
  %v1548 = vpack.c.bf16 %v1544, %v1542
  %1550 = vset.pattern.permute.xlu0 0
  %1551 = vperm.xlu0 %1550, %v1368
  %v1552 = vpop.permute.xlu0 %1551
  %1555 = vset.pattern.permute.xlu0 0
  %1556 = vperm.xlu0 %1555, %v1369
  %v1557 = vpop.permute.xlu0 %1556
  %1560 = vset.pattern.permute.xlu0 0
  %1561 = vperm.xlu0 %1560, %v1370
  %v1562 = vpop.permute.xlu0 %1561
  %1565 = vset.pattern.permute.xlu0 0
  %1566 = vperm.xlu0 %1565, %v1371
  %v1567 = vpop.permute.xlu0 %1566
  %v1573 = vunpack.c.l.b16 %v1360
  %v1574 = vunpack.c.l.b16 %v1361
  %v1575 = vunpack.c.l.b16 %v1362
  %v1576 = vunpack.c.l.b16 %v1363
  %v1577 = vpack.c.b16 %v1574, %v1573
  %v1578 = vpack.c.b16 %v1576, %v1575
  %v1580 = vsel %vm187, %v1577, 0
  %v1583 = vsel %vm187, %v1578, 0
  %1585 = vmatprep.subr.bf16.mxu0 %v1546
  %1586 = vmatpush1.bf16.msra.mxu0 %v1545
  %1587 = vmatprep.subr.bf16.mxu0 %v1548
  %1588 = vmatpush1.bf16.msra.mxu0 %v1547
  %1589 = vmatprep.subr.bf16.mxu0 0
  %1590 = vmatpush1.bf16.msra.mxu0 0
  %1591 = vmatprep.subr.bf16.mxu0 0
  %1592 = vmatpush1.bf16.msra.mxu0 0
  %1593 = vmatprep.subr.bf16.mxu0 0
  %1594 = vmatpush1.bf16.msra.mxu0 0
  %1595 = vmatprep.subr.bf16.mxu0 0
  %1596 = vmatpush1.bf16.msra.mxu0 0
  %1597 = vmatprep.subr.bf16.mxu0 0
  %1598 = vmatpush1.bf16.msra.mxu0 0
  %1599 = vmatprep.subr.bf16.mxu0 0
  %1600 = vmatpush1.bf16.msra.mxu0 0
  %1601 = vmatprep.subr.bf16.mxu0 0
  %1602 = vmatpush1.bf16.msra.mxu0 0
  %1603 = vmatprep.subr.bf16.mxu0 0
  %1604 = vmatpush1.bf16.msra.mxu0 0
  %1605 = vmatprep.subr.bf16.mxu0 0
  %1606 = vmatpush1.bf16.msra.mxu0 0
  %1607 = vmatprep.subr.bf16.mxu0 0
  %1608 = vmatpush1.bf16.msra.mxu0 0
  %1609 = vmatprep.subr.bf16.mxu0 0
  %1610 = vmatpush1.bf16.msra.mxu0 0
  %1611 = vmatprep.subr.bf16.mxu0 0
  %1612 = vmatpush1.bf16.msra.mxu0 0
  %1613 = vmatprep.subr.bf16.mxu0 0
  %1614 = vmatpush1.bf16.msra.mxu0 0
  %1615 = vmatprep.subr.bf16.mxu0 0
  %1616 = vmatpush1.bf16.msra.mxu0 0
  %1617 = vmatprep.mubr.bf16.mxu0 0
  %1618 = vmatmul.mubr.bf16.gmra.mrb[0].mxu0 %v1580
  %v1619 = vpop.f32.mrb[0].mxu0
  %v1620 = vadd.f32 %v1552, %v1619
  %v1621 = vpop.f32.mrb[0].mxu0
  %v1622 = vadd.f32 %v1552, %v1621
  %v1623 = vpop.f32.mrb[0].mxu0
  %v1624 = vadd.f32 %v1557, %v1623
  %v1625 = vpop.f32.mrb[0].mxu0
  %v1626 = vadd.f32 %v1557, %v1625
  %1627 = vmatprep.mubr.bf16.mxu0 0
  %1628 = vmatmul.mubr.bf16.gmra.mrb[0].mxu0 %v1583
  %v1629 = vpop.f32.mrb[0].mxu0
  %v1630 = vadd.f32 %v1562, %v1629
  %v1631 = vpop.f32.mrb[0].mxu0
  %v1632 = vadd.f32 %v1562, %v1631
  %v1633 = vpop.f32.mrb[0].mxu0
  %v1634 = vadd.f32 %v1567, %v1633
  %v1635 = vpop.f32.mrb[0].mxu0
  %v1636 = vadd.f32 %v1567, %v1635
  %1637 = vdwg.mxu0
  %v1638 = vtanh.pop %v1620
  %v1639 = vtanh.pop %v1622
  %v1640 = vtanh.pop %v1624
  %v1641 = vtanh.pop %v1626
  %v1642 = vtanh.pop %v1630
  %v1643 = vtanh.pop %v1632
  %v1644 = vtanh.pop %v1634
  %v1645 = vtanh.pop %v1636
  %v1646 = vmul.f32 %v1412, 0.99967206
  %v1647 = vmul.f32 %v1413, 0.99967206
  %v1648 = vmul.f32 %v1414, 0.99967206
  %v1649 = vmul.f32 %v1415, 0.99967206
  %v1650 = vmul.f32 %v1416, 0.99967206
  %v1651 = vmul.f32 %v1417, 0.99967206
  %v1652 = vmul.f32 %v1418, 0.99967206
  %v1653 = vmul.f32 %v1419, 0.99967206
  %v1654 = vmul.f32 %v1513, -2.0999337e-06
  %v1655 = vmul.f32 %v1514, -2.0999337e-06
  %v1656 = vmul.f32 %v1515, -2.0999337e-06
  %v1657 = vmul.f32 %v1516, -2.0999337e-06
  %v1658 = vmul.f32 %v1517, -2.0999337e-06
  %v1659 = vmul.f32 %v1518, -2.0999337e-06
  %v1660 = vmul.f32 %v1519, -2.0999337e-06
  %v1661 = vmul.f32 %v1520, -2.0999337e-06
  %v1662 = vadd.f32 %v1646, %v1654
  %v1663 = vadd.f32 %v1647, %v1655
  %v1664 = vadd.f32 %v1648, %v1656
  %v1665 = vadd.f32 %v1649, %v1657
  %v1666 = vadd.f32 %v1650, %v1658
  %v1667 = vadd.f32 %v1651, %v1659
  %v1668 = vadd.f32 %v1652, %v1660
  %v1669 = vadd.f32 %v1653, %v1661
  %v1670 = vmul.f32 %v1638, 0.012806186
  %v1671 = vmul.f32 %v1639, 0.012806186
  %v1672 = vmul.f32 %v1640, 0.012806186
  %v1673 = vmul.f32 %v1641, 0.012806186
  %v1674 = vmul.f32 %v1642, 0.012806186
  %v1675 = vmul.f32 %v1643, 0.012806186
  %v1676 = vmul.f32 %v1644, 0.012806186
  %v1677 = vmul.f32 %v1645, 0.012806186
  %v1678 = vadd.f32 %v1662, %v1670
  %v1679 = vadd.f32 %v1663, %v1671
  %v1680 = vadd.f32 %v1664, %v1672
  %v1681 = vadd.f32 %v1665, %v1673
  %v1682 = vadd.f32 %v1666, %v1674
  %v1683 = vadd.f32 %v1667, %v1675
  %v1684 = vadd.f32 %v1668, %v1676
  %v1685 = vadd.f32 %v1669, %v1677
  %v1686 = vld [vmem:[%s420] sm:$0xff]
  %v1687 = vld [vmem:[%s420 + $0x8] sm:$0xff]
  %v1688 = vld [vmem:[%s420 + $0x10] sm:$0xff]
  %v1689 = vld [vmem:[%s420 + $0x18] sm:$0xff]
  %v1690 = vld [vmem:[%s420 + $0x20] sm:$0xff]
  %v1691 = vld [vmem:[%s420 + $0x28] sm:$0xff]
  %v1692 = vld [vmem:[%s420 + $0x30] sm:$0xff]
  %v1693 = vld [vmem:[%s420 + $0x38] sm:$0xff]
  %v1694 = vmul.f32 %v1686, 9.999695e-05
  %v1695 = vmul.f32 %v1687, 9.999695e-05
  %v1696 = vmul.f32 %v1688, 9.999695e-05
  %v1697 = vmul.f32 %v1689, 9.999695e-05
  %v1698 = vmul.f32 %v1690, 9.999695e-05
  %v1699 = vmul.f32 %v1691, 9.999695e-05
  %v1700 = vmul.f32 %v1692, 9.999695e-05
  %v1701 = vmul.f32 %v1693, 9.999695e-05
  %v1702 = vadd.f32 %v1678, %v1694
  %v1703 = vadd.f32 %v1679, %v1695
  %v1704 = vadd.f32 %v1680, %v1696
  %v1705 = vadd.f32 %v1681, %v1697
  %v1706 = vadd.f32 %v1682, %v1698
  %v1707 = vadd.f32 %v1683, %v1699
  %v1708 = vadd.f32 %v1684, %v1700
  %v1709 = vadd.f32 %v1685, %v1701
  %v1710 = vld [vmem:[%s445] sm:$0xff]
  %v1711 = vld [vmem:[%s445 + $0x8] sm:$0xff]
  %v1712 = vld [vmem:[%s445 + $0x10] sm:$0xff]
  %v1713 = vld [vmem:[%s445 + $0x18] sm:$0xff]
  %v1714 = vld [vmem:[%s445 + $0x20] sm:$0xff]
  %v1715 = vld [vmem:[%s445 + $0x28] sm:$0xff]
  %v1716 = vld [vmem:[%s445 + $0x30] sm:$0xff]
  %v1717 = vld [vmem:[%s445 + $0x38] sm:$0xff]
  %v1718 = vmul.f32 %v1710, 0.012807627
  %v1719 = vmul.f32 %v1711, 0.012807627
  %v1720 = vmul.f32 %v1712, 0.012807627
  %v1721 = vmul.f32 %v1713, 0.012807627
  %v1722 = vmul.f32 %v1714, 0.012807627
  %v1723 = vmul.f32 %v1715, 0.012807627
  %v1724 = vmul.f32 %v1716, 0.012807627
  %v1725 = vmul.f32 %v1717, 0.012807627
  %v1726 = vadd.f32 %v1702, %v1718
  %v1727 = vadd.f32 %v1703, %v1719
  %v1728 = vadd.f32 %v1704, %v1720
  %v1729 = vadd.f32 %v1705, %v1721
  %v1730 = vadd.f32 %v1706, %v1722
  %v1731 = vadd.f32 %v1707, %v1723
  %v1732 = vadd.f32 %v1708, %v1724
  %v1733 = vadd.f32 %v1709, %v1725
  %v1734 = vsub.f32 %v1388, %v1726
  %v1735 = vsub.f32 %v1389, %v1727
  %v1736 = vsub.f32 %v1390, %v1728
  %v1737 = vsub.f32 %v1391, %v1729
  %v1738 = vsub.f32 %v1392, %v1730
  %v1739 = vsub.f32 %v1393, %v1731
  %v1740 = vsub.f32 %v1394, %v1732
  %v1741 = vsub.f32 %v1395, %v1733
  %v1742 = vmul.f32 %v1734, %v41
  %v1743 = vmul.f32 %v1735, %v42
  %v1744 = vmul.f32 %v1736, %v43
  %v1745 = vmul.f32 %v1737, %v44
  %v1746 = vmul.f32 %v1738, %v45
  %v1747 = vmul.f32 %v1739, %v46
  %v1748 = vmul.f32 %v1740, %v47
  %v1749 = vmul.f32 %v1741, %v48
  %v1750 = vadd.f32 %v1726, %v1742
  %v1751 = vadd.f32 %v1727, %v1743
  %v1752 = vadd.f32 %v1728, %v1744
  %v1753 = vadd.f32 %v1729, %v1745
  %v1754 = vadd.f32 %v1730, %v1746
  %v1755 = vadd.f32 %v1731, %v1747
  %v1756 = vadd.f32 %v1732, %v1748
  %v1757 = vadd.f32 %v1733, %v1749
  %v1758 = vpack.c.bf16 %v1752, %v1750
  %v1759 = vpack.c.bf16 %v1753, %v1751
  %v1760 = vpack.c.bf16 %v1756, %v1754
  %v1761 = vpack.c.bf16 %v1757, %v1755
  %1762 = vmatprep.subr.bf16.mxu0 %v1759
  %1763 = vmatpush1.bf16.msra.mxu0 %v1758
  %1764 = vmatprep.subr.bf16.mxu0 %v1761
  %1765 = vmatpush1.bf16.msra.mxu0 %v1760
  %1766 = vmatprep.subr.bf16.mxu0 0
  %1767 = vmatpush1.bf16.msra.mxu0 0
  %1768 = vmatprep.subr.bf16.mxu0 0
  %1769 = vmatpush1.bf16.msra.mxu0 0
  %1770 = vmatprep.subr.bf16.mxu0 0
  %1771 = vmatpush1.bf16.msra.mxu0 0
  %1772 = vmatprep.subr.bf16.mxu0 0
  %1773 = vmatpush1.bf16.msra.mxu0 0
  %1774 = vmatprep.subr.bf16.mxu0 0
  %1775 = vmatpush1.bf16.msra.mxu0 0
  %1776 = vmatprep.subr.bf16.mxu0 0
  %1777 = vmatpush1.bf16.msra.mxu0 0
  %1778 = vmatprep.subr.bf16.mxu0 0
  %1779 = vmatpush1.bf16.msra.mxu0 0
  %1780 = vmatprep.subr.bf16.mxu0 0
  %1781 = vmatpush1.bf16.msra.mxu0 0
  %1782 = vmatprep.subr.bf16.mxu0 0
  %1783 = vmatpush1.bf16.msra.mxu0 0
  %1784 = vmatprep.subr.bf16.mxu0 0
  %1785 = vmatpush1.bf16.msra.mxu0 0
  %1786 = vmatprep.subr.bf16.mxu0 0
  %1787 = vmatpush1.bf16.msra.mxu0 0
  %1788 = vmatprep.subr.bf16.mxu0 0
  %1789 = vmatpush1.bf16.msra.mxu0 0
  %1790 = vmatprep.subr.bf16.mxu0 0
  %1791 = vmatpush1.bf16.msra.mxu0 0
  %1792 = vmatprep.subr.bf16.mxu0 0
  %1793 = vmatpush1.bf16.msra.mxu0 0
  %1794 = vmatprep.mubr.bf16.mxu0 0
  %1795 = vmatmul.mubr.bf16.gmra.mrb[0].mxu0 %v1455
  %v1796 = vpop.f32.mrb[0].mxu0
  %v1797 = vadd.f32 %v1427, %v1796
  %v1798 = vpop.f32.mrb[0].mxu0
  %v1799 = vadd.f32 %v1427, %v1798
  %v1800 = vpop.f32.mrb[0].mxu0
  %v1801 = vadd.f32 %v1432, %v1800
  %v1802 = vpop.f32.mrb[0].mxu0
  %v1803 = vadd.f32 %v1432, %v1802
  %1804 = vmatprep.mubr.bf16.mxu0 0
  %1805 = vmatmul.mubr.bf16.gmra.mrb[0].mxu0 %v1458
  %v1806 = vpop.f32.mrb[0].mxu0
  %v1807 = vadd.f32 %v1437, %v1806
  %v1808 = vpop.f32.mrb[0].mxu0
  %v1809 = vadd.f32 %v1437, %v1808
  %v1810 = vpop.f32.mrb[0].mxu0
  %v1811 = vadd.f32 %v1442, %v1810
  %v1812 = vpop.f32.mrb[0].mxu0
  %v1813 = vadd.f32 %v1442, %v1812
  %1814 = vdwg.mxu0
  %v1815 = vtanh.pop %v1797
  %v1816 = vtanh.pop %v1799
  %v1817 = vtanh.pop %v1801
  %v1818 = vtanh.pop %v1803
  %v1819 = vtanh.pop %v1807
  %v1820 = vtanh.pop %v1809
  %v1821 = vtanh.pop %v1811
  %v1822 = vtanh.pop %v1813
  %v1823 = vmul.f32 %v1750, 0.9996721
  %v1824 = vmul.f32 %v1751, 0.9996721
  %v1825 = vmul.f32 %v1752, 0.9996721
  %v1826 = vmul.f32 %v1753, 0.9996721
  %v1827 = vmul.f32 %v1754, 0.9996721
  %v1828 = vmul.f32 %v1755, 0.9996721
  %v1829 = vmul.f32 %v1756, 0.9996721
  %v1830 = vmul.f32 %v1757, 0.9996721
  %v1831 = vmul.f32 %v1815, 0.0064015184
  %v1832 = vmul.f32 %v1816, 0.0064015184
  %v1833 = vmul.f32 %v1817, 0.0064015184
  %v1834 = vmul.f32 %v1818, 0.0064015184
  %v1835 = vmul.f32 %v1819, 0.0064015184
  %v1836 = vmul.f32 %v1820, 0.0064015184
  %v1837 = vmul.f32 %v1821, 0.0064015184
  %v1838 = vmul.f32 %v1822, 0.0064015184
  %v1839 = vadd.f32 %v1823, %v1831
  %v1840 = vadd.f32 %v1824, %v1832
  %v1841 = vadd.f32 %v1825, %v1833
  %v1842 = vadd.f32 %v1826, %v1834
  %v1843 = vadd.f32 %v1827, %v1835
  %v1844 = vadd.f32 %v1828, %v1836
  %v1845 = vadd.f32 %v1829, %v1837
  %v1846 = vadd.f32 %v1830, %v1838
  %v1847 = vpack.c.bf16 %v1841, %v1839
  %v1848 = vpack.c.bf16 %v1842, %v1840
  %v1849 = vpack.c.bf16 %v1845, %v1843
  %v1850 = vpack.c.bf16 %v1846, %v1844
  %1851 = vmatprep.subr.bf16.mxu0 %v1848
  %1852 = vmatpush1.bf16.msra.mxu0 %v1847
  %1853 = vmatprep.subr.bf16.mxu0 %v1850
  %1854 = vmatpush1.bf16.msra.mxu0 %v1849
  %1855 = vmatprep.subr.bf16.mxu0 0
  %1856 = vmatpush1.bf16.msra.mxu0 0
  %1857 = vmatprep.subr.bf16.mxu0 0
  %1858 = vmatpush1.bf16.msra.mxu0 0
  %1859 = vmatprep.subr.bf16.mxu0 0
  %1860 = vmatpush1.bf16.msra.mxu0 0
  %1861 = vmatprep.subr.bf16.mxu0 0
  %1862 = vmatpush1.bf16.msra.mxu0 0
  %1863 = vmatprep.subr.bf16.mxu0 0
  %1864 = vmatpush1.bf16.msra.mxu0 0
  %1865 = vmatprep.subr.bf16.mxu0 0
  %1866 = vmatpush1.bf16.msra.mxu0 0
  %1867 = vmatprep.subr.bf16.mxu0 0
  %1868 = vmatpush1.bf16.msra.mxu0 0
  %1869 = vmatprep.subr.bf16.mxu0 0
  %1870 = vmatpush1.bf16.msra.mxu0 0
  %1871 = vmatprep.subr.bf16.mxu0 0
  %1872 = vmatpush1.bf16.msra.mxu0 0
  %1873 = vmatprep.subr.bf16.mxu0 0
  %1874 = vmatpush1.bf16.msra.mxu0 0
  %1875 = vmatprep.subr.bf16.mxu0 0
  %1876 = vmatpush1.bf16.msra.mxu0 0
  %1877 = vmatprep.subr.bf16.mxu0 0
  %1878 = vmatpush1.bf16.msra.mxu0 0
  %1879 = vmatprep.subr.bf16.mxu0 0
  %1880 = vmatpush1.bf16.msra.mxu0 0
  %1881 = vmatprep.subr.bf16.mxu0 0
  %1882 = vmatpush1.bf16.msra.mxu0 0
  %1883 = vmatprep.mubr.bf16.mxu0 0
  %1884 = vmatmul.mubr.bf16.gmra.mrb[0].mxu0 %v1580
  %v1885 = vpop.f32.mrb[0].mxu0
  %v1886 = vadd.f32 %v1552, %v1885
  %v1887 = vpop.f32.mrb[0].mxu0
  %v1888 = vadd.f32 %v1552, %v1887
  %v1889 = vpop.f32.mrb[0].mxu0
  %v1890 = vadd.f32 %v1557, %v1889
  %v1891 = vpop.f32.mrb[0].mxu0
  %v1892 = vadd.f32 %v1557, %v1891
  %1893 = vmatprep.mubr.bf16.mxu0 0
  %1894 = vmatmul.mubr.bf16.gmra.mrb[0].mxu0 %v1583
  %v1895 = vpop.f32.mrb[0].mxu0
  %v1896 = vadd.f32 %v1562, %v1895
  %v1897 = vpop.f32.mrb[0].mxu0
  %v1898 = vadd.f32 %v1562, %v1897
  %v1899 = vpop.f32.mrb[0].mxu0
  %v1900 = vadd.f32 %v1567, %v1899
  %v1901 = vpop.f32.mrb[0].mxu0
  %v1902 = vadd.f32 %v1567, %v1901
  %1903 = vdwg.mxu0
  %v1904 = vtanh.pop %v1886
  %v1905 = vtanh.pop %v1888
  %v1906 = vtanh.pop %v1890
  %v1907 = vtanh.pop %v1892
  %v1908 = vtanh.pop %v1896
  %v1909 = vtanh.pop %v1898
  %v1910 = vtanh.pop %v1900
  %v1911 = vtanh.pop %v1902
  %v1912 = vmul.f32 %v1750, 0.99967206
  %v1913 = vmul.f32 %v1751, 0.99967206
  %v1914 = vmul.f32 %v1752, 0.99967206
  %v1915 = vmul.f32 %v1753, 0.99967206
  %v1916 = vmul.f32 %v1754, 0.99967206
  %v1917 = vmul.f32 %v1755, 0.99967206
  %v1918 = vmul.f32 %v1756, 0.99967206
  %v1919 = vmul.f32 %v1757, 0.99967206
  %v1920 = vmul.f32 %v1815, -2.0999337e-06
  %v1921 = vmul.f32 %v1816, -2.0999337e-06
  %v1922 = vmul.f32 %v1817, -2.0999337e-06
  %v1923 = vmul.f32 %v1818, -2.0999337e-06
  %v1924 = vmul.f32 %v1819, -2.0999337e-06
  %v1925 = vmul.f32 %v1820, -2.0999337e-06
  %v1926 = vmul.f32 %v1821, -2.0999337e-06
  %v1927 = vmul.f32 %v1822, -2.0999337e-06
  %v1928 = vadd.f32 %v1912, %v1920
  %v1929 = vadd.f32 %v1913, %v1921
  %v1930 = vadd.f32 %v1914, %v1922
  %v1931 = vadd.f32 %v1915, %v1923
  %v1932 = vadd.f32 %v1916, %v1924
  %v1933 = vadd.f32 %v1917, %v1925
  %v1934 = vadd.f32 %v1918, %v1926
  %v1935 = vadd.f32 %v1919, %v1927
  %v1936 = vmul.f32 %v1904, 0.012806186
  %v1937 = vmul.f32 %v1905, 0.012806186
  %v1938 = vmul.f32 %v1906, 0.012806186
  %v1939 = vmul.f32 %v1907, 0.012806186
  %v1940 = vmul.f32 %v1908, 0.012806186
  %v1941 = vmul.f32 %v1909, 0.012806186
  %v1942 = vmul.f32 %v1910, 0.012806186
  %v1943 = vmul.f32 %v1911, 0.012806186
  %v1944 = vadd.f32 %v1928, %v1936
  %v1945 = vadd.f32 %v1929, %v1937
  %v1946 = vadd.f32 %v1930, %v1938
  %v1947 = vadd.f32 %v1931, %v1939
  %v1948 = vadd.f32 %v1932, %v1940
  %v1949 = vadd.f32 %v1933, %v1941
  %v1950 = vadd.f32 %v1934, %v1942
  %v1951 = vadd.f32 %v1935, %v1943
  %v1952 = vld [vmem:[%s688] sm:$0xff]
  %v1953 = vld [vmem:[%s688 + $0x8] sm:$0xff]
  %v1954 = vld [vmem:[%s688 + $0x10] sm:$0xff]
  %v1955 = vld [vmem:[%s688 + $0x18] sm:$0xff]
  %v1956 = vld [vmem:[%s688 + $0x20] sm:$0xff]
  %v1957 = vld [vmem:[%s688 + $0x28] sm:$0xff]
  %v1958 = vld [vmem:[%s688 + $0x30] sm:$0xff]
  %v1959 = vld [vmem:[%s688 + $0x38] sm:$0xff]
  %v1960 = vmul.f32 %v1952, 9.999695e-05
  %v1961 = vmul.f32 %v1953, 9.999695e-05
  %v1962 = vmul.f32 %v1954, 9.999695e-05
  %v1963 = vmul.f32 %v1955, 9.999695e-05
  %v1964 = vmul.f32 %v1956, 9.999695e-05
  %v1965 = vmul.f32 %v1957, 9.999695e-05
  %v1966 = vmul.f32 %v1958, 9.999695e-05
  %v1967 = vmul.f32 %v1959, 9.999695e-05
  %v1968 = vadd.f32 %v1944, %v1960
  %v1969 = vadd.f32 %v1945, %v1961
  %v1970 = vadd.f32 %v1946, %v1962
  %v1971 = vadd.f32 %v1947, %v1963
  %v1972 = vadd.f32 %v1948, %v1964
  %v1973 = vadd.f32 %v1949, %v1965
  %v1974 = vadd.f32 %v1950, %v1966
  %v1975 = vadd.f32 %v1951, %v1967
  %v1976 = vsub.f32 %v33, %v1968
  %v1977 = vsub.f32 %v34, %v1969
  %v1978 = vsub.f32 %v35, %v1970
  %v1979 = vsub.f32 %v36, %v1971
  %v1980 = vsub.f32 %v37, %v1972
  %v1981 = vsub.f32 %v38, %v1973
  %v1982 = vsub.f32 %v39, %v1974
  %v1983 = vsub.f32 %v40, %v1975
  %v1984 = vmul.f32 %v1976, %v41
  %v1985 = vmul.f32 %v1977, %v42
  %v1986 = vmul.f32 %v1978, %v43
  %v1987 = vmul.f32 %v1979, %v44
  %v1988 = vmul.f32 %v1980, %v45
  %v1989 = vmul.f32 %v1981, %v46
  %v1990 = vmul.f32 %v1982, %v47
  %v1991 = vmul.f32 %v1983, %v48
  %v1992 = vadd.f32 %v1968, %v1984
  %v1993 = vadd.f32 %v1969, %v1985
  %v1994 = vadd.f32 %v1970, %v1986
  %v1995 = vadd.f32 %v1971, %v1987
  %v1996 = vadd.f32 %v1972, %v1988
  %v1997 = vadd.f32 %v1973, %v1989
  %v1998 = vadd.f32 %v1974, %v1990
  %v1999 = vadd.f32 %v1975, %v1991
  %2000 = vst [vmem:[%s6] sm:$0xff] %v1992
  %2001 = vst [vmem:[%s6 + $0x8] sm:$0xff] %v1993
  %2002 = vst [vmem:[%s6 + $0x10] sm:$0xff] %v1994
  %2003 = vst [vmem:[%s6 + $0x18] sm:$0xff] %v1995
  %2004 = vst [vmem:[%s6 + $0x20] sm:$0xff] %v1996
  %2005 = vst [vmem:[%s6 + $0x28] sm:$0xff] %v1997
  %2006 = vst [vmem:[%s6 + $0x30] sm:$0xff] %v1998
  %2007 = vst [vmem:[%s6 + $0x38] sm:$0xff] %v1999
  // Predicated region
  $region34: #{diffusion_inpaint.1} parent=0 // pred_check
    _
  $region35: #{diffusion_inpaint.1} parent=0 // pred_check_branch
    %2009 = sbr.rel (0) target = $region37
  $region36: #{diffusion_inpaint.1} parent=0 // pred_region
    _
  $region37: #{diffusion_inpaint.1} parent=0 // pred_fallthru
    _
  // Predicated region
  $region38: #{diffusion_inpaint.1} parent=0 // pred_check
    _
  $region39: #{diffusion_inpaint.1} parent=0 // pred_check_branch
    %2011 = sbr.rel (0) target = $region41
  $region40: #{diffusion_inpaint.1} parent=0 // pred_region
    _
  $region41: #{diffusion_inpaint.1} parent=0 // pred_fallthru
    _
  %2012 = vsyncmov [#allocation3]
  %s2013 = vpop.sfrf %2012
  %p2014 = scmp.eq.s32.totalorder %s2013, 0
  %p2015 = pneg %p2014
  %2017 = shalt.err (%p2015)
  %s2018 = scalar_lea.sflag [#allocation3], 1
  %2019 = vsyncmov %s2018
  %s2020 = vpop.sfrf %2019
  %p2021 = scmp.eq.s32.totalorder %s2020, 0
  %p2022 = pneg %p2021
  %2024 = shalt.err (%p2022)

</llo_original>
